<compile_context>
chip_gen: v6e
topology: v6e:2x2x1
jax: 0.10.0
libtpu: 0.0.40
codegen_flags: <defaults>
</compile_context>

<pallas_src>
import numpy as np
import jax
import jax.numpy as jnp
from jax import lax
from jax.experimental import pallas as pl
from jax.experimental.pallas import tpu as pltpu

NEG_SLOPE = 0.2  # nn.LeakyReLU(0.2)


# ------------------------------ Pallas kernel -------------------------------

def fused_conv_pad_relu_upsample_kernel(x_ref, w_ref, bh_ref, bwt_ref, o_ref):
    """conv3x3(valid) -> leaky-relu -> reflect-pad(1) + bilinear x2 (separable).

    x_ref:   (b, H, Cin, W)          bf16
    w_ref:   (Cout, 9*Cin)           bf16   column k = (kh*3 + kw)*Cin + ci
    bh_ref:  (Hout, Ho)              f32    fused pad+bilinear along H
    bwt_ref: (Wo, Wout)              f32    fused pad+bilinear along W (transposed)
    o_ref:   (b, Cout, Hout, Wout)   f32    NCHW output block
    """
    x = x_ref[...]                                            # (b, H, Cin, W)
    b, H, Cin, W = x.shape
    Ho, Wo = H - 2, W - 2
    Cout = w_ref.shape[0]
    Hout = bh_ref.shape[0]
    Wout = bwt_ref.shape[1]

    # --- conv as a row-batched matmul (batch = b*Ho output rows) -------------
    # G[(n, ho)] is (9*Cin, Wo); its row k = (kh*3 + kw)*Cin + ci holds the
    # shifted input row x[n, ci, ho+kh, kw:kw+Wo], so
    #     z[(n, ho)] = Wmat (Cout, 9Cin) @ G[(n, ho)]   (bf16 operands, f32 acc)
    # The tap gather is 9 small shifted copies; Ho and Wo stay separate dims,
    # which is exactly what the separable pad+upsample below needs.
    taps = []
    for kh in range(3):
        for kw in range(3):
            taps.append(x[:, kh:kh + Ho, :, kw:kw + Wo])      # (b, Ho, Cin, Wo)
    xg = jnp.concatenate(taps, axis=2)                        # (b, Ho, 9Cin, Wo)
    xg = xg.reshape(b * Ho, 9 * Cin, Wo)                      # leading merge (free)

    wmat = jnp.broadcast_to(w_ref[...], (b * Ho, Cout, 9 * Cin))
    z = jnp.einsum('rok,rkw->row', wmat, xg,
                   preferred_element_type=jnp.float32)        # (b*Ho, Cout, Wo) f32

    # LeakyReLU(0.2).  It commutes with the reflection pad (pure index copy),
    # so it can be applied before the fused pad+upsample operators.
    z = jnp.where(z > 0, z, NEG_SLOPE * z)

    # --- separable reflect-pad(1) + bilinear x2:  out = Bh @ z @ Bw^T --------
    # One small Ho<->Cout exchange, then the H pass batched over (b*Cout) and a
    # single plain 2-D W pass with M = b*Cout*Hout rows / Wout lanes.  These
    # matmuls are tiny after separation, so f32 operands cost ~nothing and keep
    # full interpolation accuracy (flip Bh/Bw^T and z to bf16 if the consumer
    # tolerates a little more rounding).
    z = z.reshape(b, Ho, Cout, Wo)
    zt = jnp.swapaxes(z, 1, 2).reshape(b * Cout, Ho, Wo)      # (b*Cout, Ho, Wo)

    bh = jnp.broadcast_to(bh_ref[...], (b * Cout, Hout, Ho))
    u = jnp.einsum('soh,shw->sow', bh, zt,
                   preferred_element_type=jnp.float32)        # (b*Cout, Hout, Wo)

    out = jnp.dot(u.reshape(b * Cout * Hout, Wo), bwt_ref[...],
                  preferred_element_type=jnp.float32)         # (b*Cout*Hout, Wout)
    o_ref[...] = out.reshape(b, Cout, Hout, Wout).astype(o_ref.dtype)


# ------------------------------ glue helpers --------------------------------

def _bilinear_matrix_align_corners(n_in, scale=2):
    """A[o, i]: bilinear interp weights, align_corners=True (UpsamplingBilinear2d)."""
    n_out = n_in * scale
    A = np.zeros((n_out, n_in), np.float32)
    for o in range(n_out):
        src = o * (n_in - 1) / (n_out - 1) if n_out > 1 else 0.0
        i0 = int(np.floor(src))
        i1 = min(i0 + 1, n_in - 1)
        f = src - i0
        A[o, i0] += 1.0 - f
        A[o, i1] += f
    return A


def _reflect_pad1_matrix(n):
    """P[p, i]: selection matrix of ReflectionPad(1) along one axis, (n+2, n).

    Requires n >= 2 (i.e. conv output spatial size >= 2).
    """
    assert n >= 2, "ReflectionPad2d(1) needs at least 2 samples per axis"
    P = np.zeros((n + 2, n), np.float32)
    P[0, 1] = 1.0
    for i in range(n):
        P[i + 1, i] = 1.0
    P[n + 1, n - 2] = 1.0
    return P


# ------------------------------ module wrapper -------------------------------

def conv_tran_relu(x_nchw, w_oihw, *, images_per_step=None):
    """ConvTranReLU.forward with withbn=False (the module default)."""
    # TODO(synk): InstanceNorm2d branch (withbn=True) not implemented.
    N, Cin, H, W = x_nchw.shape
    Cout = w_oihw.shape[0]
    Ho, Wo = H - 2, W - 2
    Hout, Wout = 2 * H, 2 * W
    assert Ho >= 2 and Wo >= 2, "ReflectionPad2d(1) needs conv output >= 2 per axis"

    # Per-step image batch: amortizes the ~0.35us/grid-step overhead while
    # keeping >= 2 'parallel' steps when N >= 2 so both v7x TensorCores get
    # work.  On single-TC v5e/v6e, pass images_per_step=N to run one fat step.
    if images_per_step is None:
        images_per_step = max(1, min(8, pl.cdiv(N, 2))) if N >= 2 else 1
    b = int(images_per_step)
    n_steps = int(pl.cdiv(N, b))
    Np = n_steps * b
    if Np != N:  # pad the batch so every grid step sees a full block
        x_nchw = jnp.concatenate(
            [x_nchw, jnp.zeros((Np - N, Cin, H, W), x_nchw.dtype)], axis=0)

    # Layout glue (tiny XLA ops): (N, H, Cin, W) bf16 image, (Cout, 9*Cin) bf16
    # weight with column k = (kh*3 + kw)*Cin + ci (accumulation stays f32).
    x_hcw = jnp.transpose(x_nchw, (0, 2, 1, 3)).astype(jnp.bfloat16)
    w_mat = (jnp.transpose(w_oihw, (0, 2, 3, 1))            # (Cout, kh, kw, Cin)
             .reshape(Cout, 9 * Cin).astype(jnp.bfloat16))

    # Separable fused (reflection-pad . bilinear x2) operators, one per axis —
    # O(H^2) each, replacing the previous O(H^4) kron(Bh, Bw) operator.
    Bh = _bilinear_matrix_align_corners(Ho + 2) @ _reflect_pad1_matrix(Ho)  # (Hout, Ho)
    Bw = _bilinear_matrix_align_corners(Wo + 2) @ _reflect_pad1_matrix(Wo)  # (Wout, Wo)
    bh = jnp.asarray(Bh, jnp.float32)
    bwt = jnp.asarray(np.ascontiguousarray(Bw.T), jnp.float32)              # (Wo, Wout)

    out = pl.pallas_call(
        fused_conv_pad_relu_upsample_kernel,
        out_shape=jax.ShapeDtypeStruct((Np, Cout, Hout, Wout), jnp.float32),
        grid=(n_steps,),
        in_specs=[
            pl.BlockSpec((b, H, Cin, W), lambda i: (i, 0, 0, 0)),
            # Constant operands: fetched once; single-buffer them instead of
            # burning 2x VMEM on blocks whose index never changes.
            pl.BlockSpec((Cout, 9 * Cin), lambda i: (0, 0),
                         pipeline_mode=pl.Buffered(1)),
            pl.BlockSpec((Hout, Ho), lambda i: (0, 0),
                         pipeline_mode=pl.Buffered(1)),
            pl.BlockSpec((Wo, Wout), lambda i: (0, 0),
                         pipeline_mode=pl.Buffered(1)),
        ],
        # Output emitted directly in NCHW, no post-kernel reshape/transpose.
        out_specs=pl.BlockSpec((b, Cout, Hout, Wout), lambda i: (i, 0, 0, 0)),
        compiler_params=pltpu.CompilerParams(
            dimension_semantics=("parallel",),
            vmem_limit_bytes=32 * 1024 * 1024),
    )(x_hcw, w_mat, bh, bwt)

    return out if Np == N else out[:N]


# ---------------------------- pure-JAX reference -----------------------------

def reference(x_nchw, w_oihw):
    """Literal PyTorch order: conv -> reflection pad -> leaky relu -> bilinear x2."""
    y = lax.conv_general_dilated(
        x_nchw, w_oihw, window_strides=(1, 1), padding='VALID',
        dimension_numbers=('NCHW', 'OIHW', 'NCHW'),
        precision=lax.Precision.HIGHEST)
    yp = jnp.pad(y, ((0, 0), (0, 0), (1, 1), (1, 1)), mode='reflect')
    z = jnp.where(yp > 0, yp, NEG_SLOPE * yp)
    Ah = jnp.asarray(_bilinear_matrix_align_corners(yp.shape[2]))
    Aw = jnp.asarray(_bilinear_matrix_align_corners(yp.shape[3]))
    return jnp.einsum('oi,ncij,pj->ncop', Ah, z, Aw,
                      precision=lax.Precision.HIGHEST)


if __name__ == "__main__":
    key = jax.random.PRNGKey(0)
    kx, kw = jax.random.split(key)

    N, Cin, H, W = 2, 4, 16, 16          # NCHW, like the PyTorch module input
    Cout = 8
    x = jax.random.normal(kx, (N, Cin, H, W), jnp.float32)
    w = jax.random.normal(kw, (Cout, Cin, 3, 3), jnp.float32) * 0.1  # Conv2d weight, bias=False

    out = jax.block_until_ready(conv_tran_relu(x, w))
    assert out.shape == (N, Cout, 2 * H, 2 * W), out.shape

    ref = jax.block_until_ready(reference(x, w))
    max_err = float(jnp.max(jnp.abs(out - ref)))
    assert max_err < 2e-2, f"mismatch vs reference: max_err={max_err}"

    print("KERNEL_OK")
</pallas_src>

<mosaic_0001>
module attributes {stable_mosaic.version = 11 : i64} {
  func.func @fused_conv_pad_relu_upsample_kernel(%arg0: i32, %arg1: memref<1x16x4x16xbf16, #tpu.memory_space<vmem>>, %arg2: memref<8x36xbf16, #tpu.memory_space<vmem>>, %arg3: memref<32x14xf32, #tpu.memory_space<vmem>>, %arg4: memref<14x32xf32, #tpu.memory_space<vmem>>, %arg5: memref<1x8x32x32xf32, #tpu.memory_space<vmem>>) attributes {dimension_semantics = [#tpu.dimension_semantics<parallel>], iteration_bounds = array<i64: 2>, scalar_prefetch = 0 : i64, scratch_operands = 0 : i64, tpu.core_type = #tpu.core_type<tc>, window_params = [{transform_indices = @transform_0, window_bounds = array<i64: 1, 16, 4, 16>}, {pipeline_mode = #tpu.pipeline_mode<synchronous>, transform_indices = @transform_1, window_bounds = array<i64: 8, 36>}, {pipeline_mode = #tpu.pipeline_mode<synchronous>, transform_indices = @transform_2, window_bounds = array<i64: 32, 14>}, {pipeline_mode = #tpu.pipeline_mode<synchronous>, transform_indices = @transform_3, window_bounds = array<i64: 14, 32>}, {transform_indices = @transform_4, window_bounds = array<i64: 1, 8, 32, 32>}]} {
    %c0 = arith.constant 0 : index
    %c0_0 = arith.constant 0 : index
    %c0_1 = arith.constant 0 : index
    %c0_2 = arith.constant 0 : index
    %0 = vector.load %arg1[%c0, %c0_0, %c0_1, %c0_2] : memref<1x16x4x16xbf16, #tpu.memory_space<vmem>>, vector<1x16x4x16xbf16>
    %1 = vector.extract_strided_slice %0 {offsets = [0, 0, 0, 0], sizes = [1, 14, 4, 14], strides = [1, 1, 1, 1]} : vector<1x16x4x16xbf16> to vector<1x14x4x14xbf16>
    %2 = vector.extract_strided_slice %0 {offsets = [0, 0, 0, 1], sizes = [1, 14, 4, 14], strides = [1, 1, 1, 1]} : vector<1x16x4x16xbf16> to vector<1x14x4x14xbf16>
    %3 = vector.extract_strided_slice %0 {offsets = [0, 0, 0, 2], sizes = [1, 14, 4, 14], strides = [1, 1, 1, 1]} : vector<1x16x4x16xbf16> to vector<1x14x4x14xbf16>
    %4 = vector.extract_strided_slice %0 {offsets = [0, 1, 0, 0], sizes = [1, 14, 4, 14], strides = [1, 1, 1, 1]} : vector<1x16x4x16xbf16> to vector<1x14x4x14xbf16>
    %5 = vector.extract_strided_slice %0 {offsets = [0, 1, 0, 1], sizes = [1, 14, 4, 14], strides = [1, 1, 1, 1]} : vector<1x16x4x16xbf16> to vector<1x14x4x14xbf16>
    %6 = vector.extract_strided_slice %0 {offsets = [0, 1, 0, 2], sizes = [1, 14, 4, 14], strides = [1, 1, 1, 1]} : vector<1x16x4x16xbf16> to vector<1x14x4x14xbf16>
    %7 = vector.extract_strided_slice %0 {offsets = [0, 2, 0, 0], sizes = [1, 14, 4, 14], strides = [1, 1, 1, 1]} : vector<1x16x4x16xbf16> to vector<1x14x4x14xbf16>
    %8 = vector.extract_strided_slice %0 {offsets = [0, 2, 0, 1], sizes = [1, 14, 4, 14], strides = [1, 1, 1, 1]} : vector<1x16x4x16xbf16> to vector<1x14x4x14xbf16>
    %9 = vector.extract_strided_slice %0 {offsets = [0, 2, 0, 2], sizes = [1, 14, 4, 14], strides = [1, 1, 1, 1]} : vector<1x16x4x16xbf16> to vector<1x14x4x14xbf16>
    %10 = tpu.concatenate %1, %2, %3, %4, %5, %6, %7, %8, %9 in 2 : vector<1x14x4x14xbf16>, vector<1x14x4x14xbf16>, vector<1x14x4x14xbf16>, vector<1x14x4x14xbf16>, vector<1x14x4x14xbf16>, vector<1x14x4x14xbf16>, vector<1x14x4x14xbf16>, vector<1x14x4x14xbf16>, vector<1x14x4x14xbf16> -> vector<1x14x36x14xbf16>
    %11 = vector.shape_cast %10 : vector<1x14x36x14xbf16> to vector<14x36x14xbf16>
    %c0_3 = arith.constant 0 : index
    %c0_4 = arith.constant 0 : index
    %12 = vector.load %arg2[%c0_3, %c0_4] : memref<8x36xbf16, #tpu.memory_space<vmem>>, vector<8x36xbf16>
    %13 = vector.shape_cast %12 : vector<8x36xbf16> to vector<1x8x36xbf16>
    %14 = vector.broadcast %13 : vector<1x8x36xbf16> to vector<14x8x36xbf16>
    "tpu.trace_start"() <{level = 10 : i32, message = "rok,rkw->row"}> : () -> ()
    %cst = arith.constant dense<0.000000e+00> : vector<14x8x14xf32>
    %15 = tpu.matmul %14, %11, %cst {dimension_numbers = #tpu.dot_dimension_numbers<[2], [1], [1], [2], [0, 0, 0, 1, 1, 2], [0], [0]>} : vector<14x8x36xbf16>, vector<14x36x14xbf16>, vector<14x8x14xf32> -> vector<14x8x14xf32>
    %cst_5 = arith.constant 0.000000e+00 : f32
    "tpu.trace_stop"() : () -> ()
    %16 = vector.broadcast %cst_5 : f32 to vector<14x8x14xf32>
    %17 = arith.cmpf ogt, %15, %16 : vector<14x8x14xf32>
    %cst_6 = arith.constant 2.000000e-01 : f32
    %18 = vector.broadcast %cst_6 : f32 to vector<14x8x14xf32>
    %19 = arith.mulf %18, %15 : vector<14x8x14xf32>
    %20 = arith.select %17, %15, %19 : vector<14x8x14xi1>, vector<14x8x14xf32>
    %21 = vector.shape_cast %20 : vector<14x8x14xf32> to vector<1x14x8x14xf32>
    %22 = tpu.transpose %21, [0, 2, 1, 3] : vector<1x14x8x14xf32> -> vector<1x8x14x14xf32>
    %23 = vector.shape_cast %22 : vector<1x8x14x14xf32> to vector<8x14x14xf32>
    %c0_7 = arith.constant 0 : index
    %c0_8 = arith.constant 0 : index
    %24 = vector.load %arg3[%c0_7, %c0_8] : memref<32x14xf32, #tpu.memory_space<vmem>>, vector<32x14xf32>
    %25 = vector.shape_cast %24 : vector<32x14xf32> to vector<1x32x14xf32>
    %26 = vector.broadcast %25 : vector<1x32x14xf32> to vector<8x32x14xf32>
    "tpu.trace_start"() <{level = 10 : i32, message = "soh,shw->sow"}> : () -> ()
    %cst_9 = arith.constant dense<0.000000e+00> : vector<8x32x14xf32>
    %27 = tpu.matmul %26, %23, %cst_9 {dimension_numbers = #tpu.dot_dimension_numbers<[2], [1], [1], [2], [0, 0, 0, 1, 1, 2], [0], [0]>} : vector<8x32x14xf32>, vector<8x14x14xf32>, vector<8x32x14xf32> -> vector<8x32x14xf32>
    "tpu.trace_stop"() : () -> ()
    %28 = vector.shape_cast %27 : vector<8x32x14xf32> to vector<256x14xf32>
    %c0_10 = arith.constant 0 : index
    %c0_11 = arith.constant 0 : index
    %29 = vector.load %arg4[%c0_10, %c0_11] : memref<14x32xf32, #tpu.memory_space<vmem>>, vector<14x32xf32>
    %cst_12 = arith.constant dense<0.000000e+00> : vector<256x32xf32>
    %30 = tpu.matmul %28, %29, %cst_12 {dimension_numbers = #tpu.dot_dimension_numbers<[1], [0], [0], [1], [0, 0, 1, 1], [], []>} : vector<256x14xf32>, vector<14x32xf32>, vector<256x32xf32> -> vector<256x32xf32>
    %31 = vector.shape_cast %30 : vector<256x32xf32> to vector<1x8x32x32xf32>
    %c0_13 = arith.constant 0 : index
    %c0_14 = arith.constant 0 : index
    %c0_15 = arith.constant 0 : index
    %c0_16 = arith.constant 0 : index
    %32 = vector.load %arg5[%c0_13, %c0_14, %c0_15, %c0_16] : memref<1x8x32x32xf32, #tpu.memory_space<vmem>>, vector<1x8x32x32xf32>
    tpu.vector_store %arg5[%c0_13, %c0_14, %c0_15, %c0_16], %31 {strides = array<i32>} : memref<1x8x32x32xf32, #tpu.memory_space<vmem>>, vector<1x8x32x32xf32>,
    return
  }
  func.func @transform_0(%arg0: i32) -> (i32, i32, i32, i32) {
    %c0_i32 = arith.constant 0 : i32
    %c0_i32_0 = arith.constant 0 : i32
    %c0_i32_1 = arith.constant 0 : i32
    %c0_i32_2 = arith.constant 0 : i32
    return %arg0, %c0_i32, %c0_i32_0, %c0_i32_1 : i32, i32, i32, i32
  }
  func.func @transform_1(%arg0: i32) -> (i32, i32) {
    %c0_i32 = arith.constant 0 : i32
    %c0_i32_0 = arith.constant 0 : i32
    %c0_i32_1 = arith.constant 0 : i32
    return %c0_i32, %c0_i32_0 : i32, i32
  }
  func.func @transform_2(%arg0: i32) -> (i32, i32) {
    %c0_i32 = arith.constant 0 : i32
    %c0_i32_0 = arith.constant 0 : i32
    %c0_i32_1 = arith.constant 0 : i32
    return %c0_i32, %c0_i32_0 : i32, i32
  }
  func.func @transform_3(%arg0: i32) -> (i32, i32) {
    %c0_i32 = arith.constant 0 : i32
    %c0_i32_0 = arith.constant 0 : i32
    %c0_i32_1 = arith.constant 0 : i32
    return %c0_i32, %c0_i32_0 : i32, i32
  }
  func.func @transform_4(%arg0: i32) -> (i32, i32, i32, i32) {
    %c0_i32 = arith.constant 0 : i32
    %c0_i32_0 = arith.constant 0 : i32
    %c0_i32_1 = arith.constant 0 : i32
    %c0_i32_2 = arith.constant 0 : i32
    return %arg0, %c0_i32, %c0_i32_0, %c0_i32_1 : i32, i32, i32, i32
  }
}

</mosaic_0001>

<llo_original>
// kernel: tpu_custom_call.1
$region0: #{tpu_custom_call.1}
  #allocation0 [shape = 'u32[]', space=smem, size = 0x4, offset = 0x4, fixed_abs, tag = 'smem constant byte address 0x4 - core index']
  #allocation1 [shape = 'u32[144,128]{1,0:T(1,128)}', space=vmem, size = 0x12000, scoped, tag = 'internal scratch']
  %s0 = inlined_call_operand.hbm [shape: bf16[2,16,4,16], index: 0, kind: input, shape index: {}]
  %s1 = inlined_call_operand.vmem [shape: bf16[8,36], index: 1, kind: input, shape index: {}]
  %s2 = inlined_call_operand.vmem [shape: f32[32,14], index: 2, kind: input, shape index: {}]
  %s3 = inlined_call_operand.vmem [shape: f32[14,32], index: 3, kind: input, shape index: {}]
  %s4 = inlined_call_operand.hbm [shape: f32[2,8,32,32], index: 4, kind: output, shape index: {}]
  %s5 = sld [smem:[#allocation0]]
  $region53: #{tpu_custom_call.1} parent=0
    _
  %s7 = ssub.s32 1, %s5
  %s8 = scalar_select 0, %s7, %s5
  $region1: #{tpu_custom_call.1} parent=0
    #allocation2 [shape = 'u8[32768]{0}', space=vmem, size = 0x8000, scoped, tag = 'input window, operand 0']
    #allocation3 [shape = 's32[2]{0}', space=sflag, size = 0x8, scoped, tag = 'scoped memory for tpu_custom_call.1']
    #allocation4 [shape = 's32[2]{0}', space=sflag, size = 0x8, scoped, tag = 'scoped memory for tpu_custom_call.1']
    #allocation5 [shape = 'u8[262144]{0}', space=vmem, size = 0x40000, scoped, tag = 'output window, operand 0']
    %9 = vsyncpa [#allocation3], 0
    %s10 = scalar_lea.sflag [#allocation3], 1
    %11 = vsyncpa %s10, 0
    %12 = vsyncpa [#allocation4], 0
    %s13 = scalar_lea.sflag [#allocation4], 1
    %14 = vsyncpa %s13, 0
    loop: start=0, step=1, limit=4
    $region2: #{tpu_custom_call.1} parent=1 // loop_pre_header
      _
    $region3: #{tpu_custom_call.1} parent=1 // loop_header
      %s16 = sphi 0, %s20
      %p17 = scmp.ge.s32.totalorder %s16, 4
      %s26 = sphi 0, %s28
      %s29 = sphi 0, %s26
      %s30 = sphi 0, %s29
      %s46 = sphi 0, %s30
      %s50 = sphi 0, %s50
      %s52 = sphi 0, %s50
      %s53 = sphi 0, %s52
      %s67 = sphi 0, %s53
      %s71 = sphi 0, %s71
      %s73 = sphi 0, %s71
      %s74 = sphi 0, %s73
      %s88 = sphi 0, %s74
      %s92 = sphi 0, %s92
      %s94 = sphi 0, %s92
      %s95 = sphi 0, %s94
      %s109 = sphi 0, %s95
      %s115 = sphi 0, %s117
      %s118 = sphi 0, %s115
      %s119 = sphi 0, %s118
      %s135 = sphi 0, %s119
    $region4: #{tpu_custom_call.1} parent=1 // loop_header_branch
      %19 = sbr.rel (%p17) target = $region8
    $region5: #{tpu_custom_call.1} parent=1 // loop_body
      %s21 = ssub.s32 %s16, 1
      %s22 = ssub.s32 %s16, 2
      %s23 = sadd.s32 %s16, 1
      %s24 = ssub.s32 %s16, %s23
      %p25 = scmp.eq.s32.totalorder %s24, 0
      %s27 = sadd.s32 %s26, 1
      %s28 = scalar_select %p25, %s26, %s27
      %p31 = pneg %p25
      %p32 = scmp.eq.s32.totalorder %s16, 1
      %p33 = por %p31, %p32
      %p34 = scmp.ne.s32.totalorder %s26, %s29
      %p35 = scmp.eq.s32.totalorder %s16, 0
      %p36 = por %p34, %p35
      %p37 = scmp.ne.s32.totalorder %s26, %s29
      %p38 = scmp.eq.s32.totalorder %s21, 1
      %p39 = por %p37, %p38
      %p40 = scmp.ne.s32.totalorder %s29, %s30
      %p41 = scmp.eq.s32.totalorder %s21, 0
      %p42 = por %p40, %p41
      %p43 = scmp.ne.s32.totalorder %s29, %s30
      %p44 = scmp.eq.s32.totalorder %s22, 1
      %p45 = por %p43, %p44
      %p47 = scmp.ne.s32.totalorder %s30, %s46
      %p48 = scmp.eq.s32.totalorder %s22, 0
      %p49 = por %p47, %p48
      %s51 = sadd.s32 %s50, 1
      %p54 = scmp.eq.s32.totalorder %s16, 1
      %p55 = scmp.ne.s32.totalorder %s50, %s52
      %p56 = scmp.eq.s32.totalorder %s16, 0
      %p57 = por %p55, %p56
      %p58 = scmp.ne.s32.totalorder %s50, %s52
      %p59 = scmp.eq.s32.totalorder %s21, 1
      %p60 = por %p58, %p59
      %p61 = scmp.ne.s32.totalorder %s52, %s53
      %p62 = scmp.eq.s32.totalorder %s21, 0
      %p63 = por %p61, %p62
      %p64 = scmp.ne.s32.totalorder %s52, %s53
      %p65 = scmp.eq.s32.totalorder %s22, 1
      %p66 = por %p64, %p65
      %p68 = scmp.ne.s32.totalorder %s53, %s67
      %p69 = scmp.eq.s32.totalorder %s22, 0
      %p70 = por %p68, %p69
      %s72 = sadd.s32 %s71, 1
      %p75 = scmp.eq.s32.totalorder %s16, 1
      %p76 = scmp.ne.s32.totalorder %s71, %s73
      %p77 = scmp.eq.s32.totalorder %s16, 0
      %p78 = por %p76, %p77
      %p79 = scmp.ne.s32.totalorder %s71, %s73
      %p80 = scmp.eq.s32.totalorder %s21, 1
      %p81 = por %p79, %p80
      %p82 = scmp.ne.s32.totalorder %s73, %s74
      %p83 = scmp.eq.s32.totalorder %s21, 0
      %p84 = por %p82, %p83
      %p85 = scmp.ne.s32.totalorder %s73, %s74
      %p86 = scmp.eq.s32.totalorder %s22, 1
      %p87 = por %p85, %p86
      %p89 = scmp.ne.s32.totalorder %s74, %s88
      %p90 = scmp.eq.s32.totalorder %s22, 0
      %p91 = por %p89, %p90
      %s93 = sadd.s32 %s92, 1
      %p96 = scmp.eq.s32.totalorder %s16, 1
      %p97 = scmp.ne.s32.totalorder %s92, %s94
      %p98 = scmp.eq.s32.totalorder %s16, 0
      %p99 = por %p97, %p98
      %p100 = scmp.ne.s32.totalorder %s92, %s94
      %p101 = scmp.eq.s32.totalorder %s21, 1
      %p102 = por %p100, %p101
      %p103 = scmp.ne.s32.totalorder %s94, %s95
      %p104 = scmp.eq.s32.totalorder %s21, 0
      %p105 = por %p103, %p104
      %p106 = scmp.ne.s32.totalorder %s94, %s95
      %p107 = scmp.eq.s32.totalorder %s22, 1
      %p108 = por %p106, %p107
      %p110 = scmp.ne.s32.totalorder %s95, %s109
      %p111 = scmp.eq.s32.totalorder %s22, 0
      %p112 = por %p110, %p111
      %s113 = ssub.s32 %s16, %s23
      %p114 = scmp.eq.s32.totalorder %s113, 0
      %s116 = sadd.s32 %s115, 1
      %s117 = scalar_select %p114, %s115, %s116
      %p120 = pneg %p114
      %p121 = scmp.eq.s32.totalorder %s16, 1
      %p122 = por %p120, %p121
      %p123 = scmp.ne.s32.totalorder %s115, %s118
      %p124 = scmp.eq.s32.totalorder %s16, 0
      %p125 = por %p123, %p124
      %p126 = scmp.ne.s32.totalorder %s115, %s118
      %p127 = scmp.eq.s32.totalorder %s21, 1
      %p128 = por %p126, %p127
      %p129 = scmp.ne.s32.totalorder %s118, %s119
      %p130 = scmp.eq.s32.totalorder %s21, 0
      %p131 = por %p129, %p130
      %p132 = scmp.ne.s32.totalorder %s118, %s119
      %p133 = scmp.eq.s32.totalorder %s22, 1
      %p134 = por %p132, %p133
      %p136 = scmp.ne.s32.totalorder %s119, %s135
      %p137 = scmp.eq.s32.totalorder %s22, 0
      %p138 = por %p136, %p137
      %p139 = scmp.le.s32.totalorder 1, %s16
      %p140 = scmp.lt.s32.totalorder %s16, 3
      %p141 = pnand %p139, %p140
      %p142 = pneg %p141
      // Predicated region
      $region9: #{tpu_custom_call.1} parent=5 // pred_check
        _
      $region10: #{tpu_custom_call.1} parent=5 // pred_check_branch
        %144 = sbr.rel (%p141) target = $region12
      $region11: #{tpu_custom_call.1} parent=5 // pred_region
        %s145 = ssub.s32 %s16, 1
        // Predicated region
        $region13: #{tpu_custom_call.1} parent=11 // pred_check
          %p146 = pneg %p63
        $region14: #{tpu_custom_call.1} parent=11 // pred_check_branch
          %148 = sbr.rel (%p146) target = $region16
        $region15: #{tpu_custom_call.1} parent=11 // pred_region
          _
        $region16: #{tpu_custom_call.1} parent=11 // pred_fallthru
          _
        // Predicated region
        $region17: #{tpu_custom_call.1} parent=11 // pred_check
          %p149 = pneg %p84
        $region18: #{tpu_custom_call.1} parent=11 // pred_check_branch
          %151 = sbr.rel (%p149) target = $region20
        $region19: #{tpu_custom_call.1} parent=11 // pred_region
          _
        $region20: #{tpu_custom_call.1} parent=11 // pred_fallthru
          _
        // Predicated region
        $region21: #{tpu_custom_call.1} parent=11 // pred_check
          %p152 = pneg %p105
        $region22: #{tpu_custom_call.1} parent=11 // pred_check_branch
          %154 = sbr.rel (%p152) target = $region24
        $region23: #{tpu_custom_call.1} parent=11 // pred_region
          _
        $region24: #{tpu_custom_call.1} parent=11 // pred_fallthru
          _
      $region12: #{tpu_custom_call.1} parent=5 // pred_fallthru
        _
      %p155 = scmp.lt.s32.totalorder %s16, 2
      // Predicated region
      $region25: #{tpu_custom_call.1} parent=5 // pred_check
        %p156 = pneg %p155
      $region26: #{tpu_custom_call.1} parent=5 // pred_check_branch
        %158 = sbr.rel (%p156) target = $region28
      $region27: #{tpu_custom_call.1} parent=5 // pred_region
        // Predicated region
        $region29: #{tpu_custom_call.1} parent=27 // pred_check
          %p159 = pneg %p36
        $region30: #{tpu_custom_call.1} parent=27 // pred_check_branch
          %161 = sbr.rel (%p159) target = $region32
        $region31: #{tpu_custom_call.1} parent=27 // pred_region
          %s162 = sand.u32 %s26, 1
          %s163 = scalar_lea.sflag [#allocation3], %s162
          %s164 = sand.u32 %s26, 1
          %s165 = smul.addr %s164, 32
          %s166 = scalar_lea.vmem [#allocation2], %s165
          %s168 = ssub.s32 512, 512
          %169 = vsyncadd %s163, %s168
          %s170 = smul.addr %s16, 16
          %s171 = smul.addr %s170, 32
          %s172 = scalar_lea.hbm %s0, %s171
          %s173 = sshll.u32 %s166, 4
          %s174 = int_to_ptr.vmem [resolvable:$true] %s173
          %179 = dma.hbm_to_vmem [thread:$0]  %s172, 512, %s174, %s163, 32, 32, 2
        $region32: #{tpu_custom_call.1} parent=27 // pred_fallthru
          _
      $region28: #{tpu_custom_call.1} parent=5 // pred_fallthru
        _
      %p180 = scmp.le.s32.totalorder 1, %s16
      %p181 = scmp.lt.s32.totalorder %s16, 3
      %p182 = pnand %p180, %p181
      %p183 = pneg %p182
      // Predicated region
      $region33: #{tpu_custom_call.1} parent=5 // pred_check
        _
      $region34: #{tpu_custom_call.1} parent=5 // pred_check_branch
        %185 = sbr.rel (%p182) target = $region36
      $region35: #{tpu_custom_call.1} parent=5 // pred_region
        %s186 = ssub.s32 %s16, 1
        %s187 = sand.u32 %s29, 1
        %s188 = scalar_lea.sflag [#allocation3], %s187
        %s189 = sand.u32 %s29, 1
        %s190 = smul.addr %s189, 32
        %s191 = scalar_lea.vmem [#allocation2], %s190
        // Predicated region
        $region37: #{tpu_custom_call.1} parent=35 // pred_check
          %p192 = pneg %p42
        $region38: #{tpu_custom_call.1} parent=35 // pred_check_branch
          %194 = sbr.rel (%p192) target = $region40
        $region39: #{tpu_custom_call.1} parent=35 // pred_region
          %195 = dma.done %s188, 512
        $region40: #{tpu_custom_call.1} parent=35 // pred_fallthru
          _
        %s196 = sand.u32 %s29, 1
        %s197 = scalar_lea.sflag [#allocation3], %s196
        %s198 = sand.u32 %s29, 1
        %s199 = smul.addr %s198, 32
        %s200 = scalar_lea.vmem [#allocation2], %s199
        %p201 = pneg %p42
        %p202 = pneg %p39
        %p203 = pneg %p63
        %p204 = pneg %p60
        %p205 = pneg %p84
        %p206 = pneg %p81
        %p207 = pneg %p105
        %p208 = pneg %p102
        %p209 = pneg %p131
        %p210 = pneg %p128
        %s211 = sand.u32 %s118, 1
        %s212 = scalar_lea.sflag [#allocation4], %s211
        %s213 = sand.u32 %s118, 1
        %s214 = smul.addr %s213, 256
        %s215 = scalar_lea.vmem [#allocation5], %s214
        %v217 = vld [vmem:[%s191] sm:$0x3]
        %v218 = vld [vmem:[%s191 + $0x2] sm:$0x3]
        %v219 = vld [vmem:[%s191 + $0x4] sm:$0x3]
        %v220 = vld [vmem:[%s191 + $0x6] sm:$0x3]
        %v221 = vld [vmem:[%s191 + $0x8] sm:$0x3]
        %v222 = vld [vmem:[%s191 + $0xa] sm:$0x3]
        %v223 = vld [vmem:[%s191 + $0xc] sm:$0x3]
        %v224 = vld [vmem:[%s191 + $0xe] sm:$0x3]
        %v225 = vld [vmem:[%s191 + $0x10] sm:$0x3]
        %v226 = vld [vmem:[%s191 + $0x12] sm:$0x3]
        %v227 = vld [vmem:[%s191 + $0x14] sm:$0x3]
        %v228 = vld [vmem:[%s191 + $0x16] sm:$0x3]
        %v229 = vld [vmem:[%s191 + $0x18] sm:$0x3]
        %v230 = vld [vmem:[%s191 + $0x1a] sm:$0x3]
        %v231 = vld [vmem:[%s191 + $0x1c] sm:$0x3]
        %v232 = vld [vmem:[%s191 + $0x1e] sm:$0x3]
        %v247 = vcombine.low %v217, %v217
        %v249 = vunpack.c.l.s4 1983009808
        %v250 = vunpack.c.0.s8 %v249
        %v251 = vlaneseq
        %v252 = vshrl.u32 %v251, 7
        %v253 = vsub.s32 %v250, %v252
        %v254 = vrot.slane %v247, %v253
        %v256 = vunpack.c.l.s4 1983009808
        %v257 = vunpack.c.0.s8 %v256
        %v258 = vlaneseq
        %v259 = vshrl.u32 %v258, 7
        %v260 = vsub.s32 %v257, %v259
        %v261 = vrot.slane %v217, %v260
        %v262 = vcombine.low %v218, %v218
        %v264 = vunpack.c.l.s4 1983009808
        %v265 = vunpack.c.0.s8 %v264
        %v266 = vlaneseq
        %v267 = vshrl.u32 %v266, 7
        %v268 = vsub.s32 %v265, %v267
        %v269 = vrot.slane %v262, %v268
        %v271 = vunpack.c.l.s4 1983009808
        %v272 = vunpack.c.0.s8 %v271
        %v273 = vlaneseq
        %v274 = vshrl.u32 %v273, 7
        %v275 = vsub.s32 %v272, %v274
        %v276 = vrot.slane %v218, %v275
        %v277 = vcombine.low %v219, %v219
        %v279 = vunpack.c.l.s4 1983009808
        %v280 = vunpack.c.0.s8 %v279
        %v281 = vlaneseq
        %v282 = vshrl.u32 %v281, 7
        %v283 = vsub.s32 %v280, %v282
        %v284 = vrot.slane %v277, %v283
        %v286 = vunpack.c.l.s4 1983009808
        %v287 = vunpack.c.0.s8 %v286
        %v288 = vlaneseq
        %v289 = vshrl.u32 %v288, 7
        %v290 = vsub.s32 %v287, %v289
        %v291 = vrot.slane %v219, %v290
        %v292 = vcombine.low %v220, %v220
        %v294 = vunpack.c.l.s4 1983009808
        %v295 = vunpack.c.0.s8 %v294
        %v296 = vlaneseq
        %v297 = vshrl.u32 %v296, 7
        %v298 = vsub.s32 %v295, %v297
        %v299 = vrot.slane %v292, %v298
        %v301 = vunpack.c.l.s4 1983009808
        %v302 = vunpack.c.0.s8 %v301
        %v303 = vlaneseq
        %v304 = vshrl.u32 %v303, 7
        %v305 = vsub.s32 %v302, %v304
        %v306 = vrot.slane %v220, %v305
        %v307 = vcombine.low %v221, %v221
        %v309 = vunpack.c.l.s4 1983009808
        %v310 = vunpack.c.0.s8 %v309
        %v311 = vlaneseq
        %v312 = vshrl.u32 %v311, 7
        %v313 = vsub.s32 %v310, %v312
        %v314 = vrot.slane %v307, %v313
        %v316 = vunpack.c.l.s4 1983009808
        %v317 = vunpack.c.0.s8 %v316
        %v318 = vlaneseq
        %v319 = vshrl.u32 %v318, 7
        %v320 = vsub.s32 %v317, %v319
        %v321 = vrot.slane %v221, %v320
        %v322 = vcombine.low %v222, %v222
        %v324 = vunpack.c.l.s4 1983009808
        %v325 = vunpack.c.0.s8 %v324
        %v326 = vlaneseq
        %v327 = vshrl.u32 %v326, 7
        %v328 = vsub.s32 %v325, %v327
        %v329 = vrot.slane %v322, %v328
        %v331 = vunpack.c.l.s4 1983009808
        %v332 = vunpack.c.0.s8 %v331
        %v333 = vlaneseq
        %v334 = vshrl.u32 %v333, 7
        %v335 = vsub.s32 %v332, %v334
        %v336 = vrot.slane %v222, %v335
        %v337 = vcombine.low %v223, %v223
        %v339 = vunpack.c.l.s4 1983009808
        %v340 = vunpack.c.0.s8 %v339
        %v341 = vlaneseq
        %v342 = vshrl.u32 %v341, 7
        %v343 = vsub.s32 %v340, %v342
        %v344 = vrot.slane %v337, %v343
        %v346 = vunpack.c.l.s4 1983009808
        %v347 = vunpack.c.0.s8 %v346
        %v348 = vlaneseq
        %v349 = vshrl.u32 %v348, 7
        %v350 = vsub.s32 %v347, %v349
        %v351 = vrot.slane %v223, %v350
        %v352 = vcombine.low %v224, %v224
        %v354 = vunpack.c.l.s4 1983009808
        %v355 = vunpack.c.0.s8 %v354
        %v356 = vlaneseq
        %v357 = vshrl.u32 %v356, 7
        %v358 = vsub.s32 %v355, %v357
        %v359 = vrot.slane %v352, %v358
        %v361 = vunpack.c.l.s4 1983009808
        %v362 = vunpack.c.0.s8 %v361
        %v363 = vlaneseq
        %v364 = vshrl.u32 %v363, 7
        %v365 = vsub.s32 %v362, %v364
        %v366 = vrot.slane %v224, %v365
        %v367 = vcombine.low %v225, %v225
        %v369 = vunpack.c.l.s4 1983009808
        %v370 = vunpack.c.0.s8 %v369
        %v371 = vlaneseq
        %v372 = vshrl.u32 %v371, 7
        %v373 = vsub.s32 %v370, %v372
        %v374 = vrot.slane %v367, %v373
        %v376 = vunpack.c.l.s4 1983009808
        %v377 = vunpack.c.0.s8 %v376
        %v378 = vlaneseq
        %v379 = vshrl.u32 %v378, 7
        %v380 = vsub.s32 %v377, %v379
        %v381 = vrot.slane %v225, %v380
        %v382 = vcombine.low %v226, %v226
        %v384 = vunpack.c.l.s4 1983009808
        %v385 = vunpack.c.0.s8 %v384
        %v386 = vlaneseq
        %v387 = vshrl.u32 %v386, 7
        %v388 = vsub.s32 %v385, %v387
        %v389 = vrot.slane %v382, %v388
        %v391 = vunpack.c.l.s4 1983009808
        %v392 = vunpack.c.0.s8 %v391
        %v393 = vlaneseq
        %v394 = vshrl.u32 %v393, 7
        %v395 = vsub.s32 %v392, %v394
        %v396 = vrot.slane %v226, %v395
        %v397 = vcombine.low %v227, %v227
        %v399 = vunpack.c.l.s4 1983009808
        %v400 = vunpack.c.0.s8 %v399
        %v401 = vlaneseq
        %v402 = vshrl.u32 %v401, 7
        %v403 = vsub.s32 %v400, %v402
        %v404 = vrot.slane %v397, %v403
        %v406 = vunpack.c.l.s4 1983009808
        %v407 = vunpack.c.0.s8 %v406
        %v408 = vlaneseq
        %v409 = vshrl.u32 %v408, 7
        %v410 = vsub.s32 %v407, %v409
        %v411 = vrot.slane %v227, %v410
        %v412 = vcombine.low %v228, %v228
        %v414 = vunpack.c.l.s4 1983009808
        %v415 = vunpack.c.0.s8 %v414
        %v416 = vlaneseq
        %v417 = vshrl.u32 %v416, 7
        %v418 = vsub.s32 %v415, %v417
        %v419 = vrot.slane %v412, %v418
        %v421 = vunpack.c.l.s4 1983009808
        %v422 = vunpack.c.0.s8 %v421
        %v423 = vlaneseq
        %v424 = vshrl.u32 %v423, 7
        %v425 = vsub.s32 %v422, %v424
        %v426 = vrot.slane %v228, %v425
        %v427 = vcombine.low %v229, %v229
        %v429 = vunpack.c.l.s4 1983009808
        %v430 = vunpack.c.0.s8 %v429
        %v431 = vlaneseq
        %v432 = vshrl.u32 %v431, 7
        %v433 = vsub.s32 %v430, %v432
        %v434 = vrot.slane %v427, %v433
        %v436 = vunpack.c.l.s4 1983009808
        %v437 = vunpack.c.0.s8 %v436
        %v438 = vlaneseq
        %v439 = vshrl.u32 %v438, 7
        %v440 = vsub.s32 %v437, %v439
        %v441 = vrot.slane %v229, %v440
        %v442 = vcombine.low %v230, %v230
        %v444 = vunpack.c.l.s4 1983009808
        %v445 = vunpack.c.0.s8 %v444
        %v446 = vlaneseq
        %v447 = vshrl.u32 %v446, 7
        %v448 = vsub.s32 %v445, %v447
        %v449 = vrot.slane %v442, %v448
        %v451 = vunpack.c.l.s4 1983009808
        %v452 = vunpack.c.0.s8 %v451
        %v453 = vlaneseq
        %v454 = vshrl.u32 %v453, 7
        %v455 = vsub.s32 %v452, %v454
        %v456 = vrot.slane %v230, %v455
        %457 = vrot.lane.b32.xlu0 %v254, 127
        %v458 = vpop.permute.xlu0 %457
        %459 = vrot.lane.b32.xlu0 %v269, 127
        %v460 = vpop.permute.xlu0 %459
        %461 = vrot.lane.b32.xlu0 %v284, 127
        %v462 = vpop.permute.xlu0 %461
        %463 = vrot.lane.b32.xlu0 %v299, 127
        %v464 = vpop.permute.xlu0 %463
        %465 = vrot.lane.b32.xlu0 %v314, 127
        %v466 = vpop.permute.xlu0 %465
        %467 = vrot.lane.b32.xlu0 %v329, 127
        %v468 = vpop.permute.xlu0 %467
        %469 = vrot.lane.b32.xlu0 %v344, 127
        %v470 = vpop.permute.xlu0 %469
        %471 = vrot.lane.b32.xlu0 %v359, 127
        %v472 = vpop.permute.xlu0 %471
        %473 = vrot.lane.b32.xlu0 %v374, 127
        %v474 = vpop.permute.xlu0 %473
        %475 = vrot.lane.b32.xlu0 %v389, 127
        %v476 = vpop.permute.xlu0 %475
        %477 = vrot.lane.b32.xlu0 %v404, 127
        %v478 = vpop.permute.xlu0 %477
        %479 = vrot.lane.b32.xlu0 %v419, 127
        %v480 = vpop.permute.xlu0 %479
        %481 = vrot.lane.b32.xlu0 %v434, 127
        %v482 = vpop.permute.xlu0 %481
        %483 = vrot.lane.b32.xlu0 %v449, 127
        %v484 = vpop.permute.xlu0 %483
        %v485 = vcombine.low %v261, %v261
        %v486 = vcombine.low %v276, %v276
        %v487 = vcombine.low %v291, %v291
        %v488 = vcombine.low %v306, %v306
        %v489 = vcombine.low %v321, %v321
        %v490 = vcombine.low %v336, %v336
        %v491 = vcombine.low %v351, %v351
        %v492 = vcombine.low %v366, %v366
        %v493 = vcombine.low %v381, %v381
        %v494 = vcombine.low %v396, %v396
        %v495 = vcombine.low %v411, %v411
        %v496 = vcombine.low %v426, %v426
        %v497 = vcombine.low %v441, %v441
        %v498 = vcombine.low %v456, %v456
        %499 = vrot.lane.b32.xlu0 %v485, 126
        %v500 = vpop.permute.xlu0 %499
        %501 = vrot.lane.b32.xlu0 %v486, 126
        %v502 = vpop.permute.xlu0 %501
        %503 = vrot.lane.b32.xlu0 %v487, 126
        %v504 = vpop.permute.xlu0 %503
        %505 = vrot.lane.b32.xlu0 %v488, 126
        %v506 = vpop.permute.xlu0 %505
        %507 = vrot.lane.b32.xlu0 %v489, 126
        %v508 = vpop.permute.xlu0 %507
        %509 = vrot.lane.b32.xlu0 %v490, 126
        %v510 = vpop.permute.xlu0 %509
        %511 = vrot.lane.b32.xlu0 %v491, 126
        %v512 = vpop.permute.xlu0 %511
        %513 = vrot.lane.b32.xlu0 %v492, 126
        %v514 = vpop.permute.xlu0 %513
        %515 = vrot.lane.b32.xlu0 %v493, 126
        %v516 = vpop.permute.xlu0 %515
        %517 = vrot.lane.b32.xlu0 %v494, 126
        %v518 = vpop.permute.xlu0 %517
        %519 = vrot.lane.b32.xlu0 %v495, 126
        %v520 = vpop.permute.xlu0 %519
        %521 = vrot.lane.b32.xlu0 %v496, 126
        %v522 = vpop.permute.xlu0 %521
        %523 = vrot.lane.b32.xlu0 %v497, 126
        %v524 = vpop.permute.xlu0 %523
        %525 = vrot.lane.b32.xlu0 %v498, 126
        %v526 = vpop.permute.xlu0 %525
        %v528 = vcombine.low %v269, %v269
        %v529 = vcombine.low %v284, %v284
        %v530 = vcombine.low %v299, %v299
        %v531 = vcombine.low %v314, %v314
        %v532 = vcombine.low %v329, %v329
        %v533 = vcombine.low %v344, %v344
        %v534 = vcombine.low %v359, %v359
        %v535 = vcombine.low %v374, %v374
        %v536 = vcombine.low %v389, %v389
        %v537 = vcombine.low %v404, %v404
        %v538 = vcombine.low %v419, %v419
        %v539 = vcombine.low %v434, %v434
        %v540 = vcombine.low %v449, %v449
        %v541 = vcombine.low %v231, %v231
        %v543 = vunpack.c.l.s4 1983009808
        %v544 = vunpack.c.0.s8 %v543
        %v545 = vlaneseq
        %v546 = vshrl.u32 %v545, 7
        %v547 = vsub.s32 %v544, %v546
        %v548 = vrot.slane %v541, %v547
        %v550 = vunpack.c.l.s4 1983009808
        %v551 = vunpack.c.0.s8 %v550
        %v552 = vlaneseq
        %v553 = vshrl.u32 %v552, 7
        %v554 = vsub.s32 %v551, %v553
        %v555 = vrot.slane %v231, %v554
        %v556 = vcombine.low %v548, %v548
        %557 = vrot.lane.b32.xlu0 %v276, 127
        %v558 = vpop.permute.xlu0 %557
        %559 = vrot.lane.b32.xlu0 %v291, 127
        %v560 = vpop.permute.xlu0 %559
        %561 = vrot.lane.b32.xlu0 %v306, 127
        %v562 = vpop.permute.xlu0 %561
        %563 = vrot.lane.b32.xlu0 %v321, 127
        %v564 = vpop.permute.xlu0 %563
        %565 = vrot.lane.b32.xlu0 %v336, 127
        %v566 = vpop.permute.xlu0 %565
        %567 = vrot.lane.b32.xlu0 %v351, 127
        %v568 = vpop.permute.xlu0 %567
        %569 = vrot.lane.b32.xlu0 %v366, 127
        %v570 = vpop.permute.xlu0 %569
        %571 = vrot.lane.b32.xlu0 %v381, 127
        %v572 = vpop.permute.xlu0 %571
        %573 = vrot.lane.b32.xlu0 %v396, 127
        %v574 = vpop.permute.xlu0 %573
        %575 = vrot.lane.b32.xlu0 %v411, 127
        %v576 = vpop.permute.xlu0 %575
        %577 = vrot.lane.b32.xlu0 %v426, 127
        %v578 = vpop.permute.xlu0 %577
        %579 = vrot.lane.b32.xlu0 %v441, 127
        %v580 = vpop.permute.xlu0 %579
        %581 = vrot.lane.b32.xlu0 %v456, 127
        %v582 = vpop.permute.xlu0 %581
        %583 = vrot.lane.b32.xlu0 %v555, 127
        %v584 = vpop.permute.xlu0 %583
        %585 = vrot.lane.b32.xlu0 %v269, 126
        %v586 = vpop.permute.xlu0 %585
        %587 = vrot.lane.b32.xlu0 %v284, 126
        %v588 = vpop.permute.xlu0 %587
        %589 = vrot.lane.b32.xlu0 %v299, 126
        %v590 = vpop.permute.xlu0 %589
        %591 = vrot.lane.b32.xlu0 %v314, 126
        %v592 = vpop.permute.xlu0 %591
        %593 = vrot.lane.b32.xlu0 %v329, 126
        %v594 = vpop.permute.xlu0 %593
        %595 = vrot.lane.b32.xlu0 %v344, 126
        %v596 = vpop.permute.xlu0 %595
        %597 = vrot.lane.b32.xlu0 %v359, 126
        %v598 = vpop.permute.xlu0 %597
        %599 = vrot.lane.b32.xlu0 %v374, 126
        %v600 = vpop.permute.xlu0 %599
        %601 = vrot.lane.b32.xlu0 %v389, 126
        %v602 = vpop.permute.xlu0 %601
        %603 = vrot.lane.b32.xlu0 %v404, 126
        %v604 = vpop.permute.xlu0 %603
        %605 = vrot.lane.b32.xlu0 %v419, 126
        %v606 = vpop.permute.xlu0 %605
        %607 = vrot.lane.b32.xlu0 %v434, 126
        %v608 = vpop.permute.xlu0 %607
        %609 = vrot.lane.b32.xlu0 %v449, 126
        %v610 = vpop.permute.xlu0 %609
        %611 = vrot.lane.b32.xlu0 %v548, 126
        %v612 = vpop.permute.xlu0 %611
        %v614 = vcombine.low %v555, %v555
        %v616 = vunpack.c.l.s4 1983009808
        %v617 = vunpack.c.0.s8 %v616
        %v618 = vlaneseq
        %v619 = vshrl.u32 %v618, 7
        %v620 = vsub.s32 %v617, %v619
        %v621 = vrot.slane %v232, %v620
        %v622 = vcombine.low %v621, %v621
        %v623 = vcombine.low %v232, %v232
        %v625 = vunpack.c.l.s4 1983009808
        %v626 = vunpack.c.0.s8 %v625
        %v627 = vlaneseq
        %v628 = vshrl.u32 %v627, 7
        %v629 = vsub.s32 %v626, %v628
        %v630 = vrot.slane %v623, %v629
        %v631 = vcombine.low %v630, %v630
        %632 = vrot.lane.b32.xlu0 %v529, 127
        %v633 = vpop.permute.xlu0 %632
        %634 = vrot.lane.b32.xlu0 %v530, 127
        %v635 = vpop.permute.xlu0 %634
        %636 = vrot.lane.b32.xlu0 %v531, 127
        %v637 = vpop.permute.xlu0 %636
        %638 = vrot.lane.b32.xlu0 %v532, 127
        %v639 = vpop.permute.xlu0 %638
        %640 = vrot.lane.b32.xlu0 %v533, 127
        %v641 = vpop.permute.xlu0 %640
        %642 = vrot.lane.b32.xlu0 %v534, 127
        %v643 = vpop.permute.xlu0 %642
        %644 = vrot.lane.b32.xlu0 %v535, 127
        %v645 = vpop.permute.xlu0 %644
        %646 = vrot.lane.b32.xlu0 %v536, 127
        %v647 = vpop.permute.xlu0 %646
        %648 = vrot.lane.b32.xlu0 %v537, 127
        %v649 = vpop.permute.xlu0 %648
        %650 = vrot.lane.b32.xlu0 %v538, 127
        %v651 = vpop.permute.xlu0 %650
        %652 = vrot.lane.b32.xlu0 %v539, 127
        %v653 = vpop.permute.xlu0 %652
        %654 = vrot.lane.b32.xlu0 %v540, 127
        %v655 = vpop.permute.xlu0 %654
        %656 = vrot.lane.b32.xlu0 %v556, 127
        %v657 = vpop.permute.xlu0 %656
        %658 = vrot.lane.b32.xlu0 %v631, 127
        %v659 = vpop.permute.xlu0 %658
        %660 = vrot.lane.b32.xlu0 %v291, 126
        %v661 = vpop.permute.xlu0 %660
        %662 = vrot.lane.b32.xlu0 %v306, 126
        %v663 = vpop.permute.xlu0 %662
        %664 = vrot.lane.b32.xlu0 %v321, 126
        %v665 = vpop.permute.xlu0 %664
        %666 = vrot.lane.b32.xlu0 %v336, 126
        %v667 = vpop.permute.xlu0 %666
        %668 = vrot.lane.b32.xlu0 %v351, 126
        %v669 = vpop.permute.xlu0 %668
        %670 = vrot.lane.b32.xlu0 %v366, 126
        %v671 = vpop.permute.xlu0 %670
        %672 = vrot.lane.b32.xlu0 %v381, 126
        %v673 = vpop.permute.xlu0 %672
        %674 = vrot.lane.b32.xlu0 %v396, 126
        %v675 = vpop.permute.xlu0 %674
        %676 = vrot.lane.b32.xlu0 %v411, 126
        %v677 = vpop.permute.xlu0 %676
        %678 = vrot.lane.b32.xlu0 %v426, 126
        %v679 = vpop.permute.xlu0 %678
        %680 = vrot.lane.b32.xlu0 %v441, 126
        %v681 = vpop.permute.xlu0 %680
        %682 = vrot.lane.b32.xlu0 %v456, 126
        %v683 = vpop.permute.xlu0 %682
        %684 = vrot.lane.b32.xlu0 %v555, 126
        %v685 = vpop.permute.xlu0 %684
        %686 = vrot.lane.b32.xlu0 %v621, 126
        %v687 = vpop.permute.xlu0 %686
        %vm688 = vcmask 1041408
        %v691 = vsel %vm688, %v217, %v458
        %v694 = vsel %vm688, %v218, %v460
        %v697 = vsel %vm688, %v219, %v462
        %v700 = vsel %vm688, %v220, %v464
        %v703 = vsel %vm688, %v221, %v466
        %v706 = vsel %vm688, %v222, %v468
        %v709 = vsel %vm688, %v223, %v470
        %v712 = vsel %vm688, %v224, %v472
        %v715 = vsel %vm688, %v225, %v474
        %v718 = vsel %vm688, %v226, %v476
        %v721 = vsel %vm688, %v227, %v478
        %v724 = vsel %vm688, %v228, %v480
        %v727 = vsel %vm688, %v229, %v482
        %v730 = vsel %vm688, %v230, %v484
        %vm731 = vcmask 1043456
        %v733 = vsel %vm731, %v691, %v500
        %v735 = vsel %vm731, %v694, %v502
        %v737 = vsel %vm731, %v697, %v504
        %v739 = vsel %vm731, %v700, %v506
        %v741 = vsel %vm731, %v703, %v508
        %v743 = vsel %vm731, %v706, %v510
        %v745 = vsel %vm731, %v709, %v512
        %v747 = vsel %vm731, %v712, %v514
        %v749 = vsel %vm731, %v715, %v516
        %v751 = vsel %vm731, %v718, %v518
        %v753 = vsel %vm731, %v721, %v520
        %v755 = vsel %vm731, %v724, %v522
        %v757 = vsel %vm731, %v727, %v524
        %v759 = vsel %vm731, %v730, %v526
        %vm760 = vcmask 1045504
        %v762 = vsel %vm760, %v733, %v528
        %v765 = vsel %vm760, %v735, %v529
        %v768 = vsel %vm760, %v737, %v530
        %v771 = vsel %vm760, %v739, %v531
        %v774 = vsel %vm760, %v741, %v532
        %v777 = vsel %vm760, %v743, %v533
        %v780 = vsel %vm760, %v745, %v534
        %v783 = vsel %vm760, %v747, %v535
        %v786 = vsel %vm760, %v749, %v536
        %v789 = vsel %vm760, %v751, %v537
        %v792 = vsel %vm760, %v753, %v538
        %v795 = vsel %vm760, %v755, %v539
        %v798 = vsel %vm760, %v757, %v540
        %v801 = vsel %vm760, %v759, %v556
        %v805 = vsel %vm688, %v558, %v586
        %v808 = vsel %vm688, %v560, %v588
        %v811 = vsel %vm688, %v562, %v590
        %v814 = vsel %vm688, %v564, %v592
        %v817 = vsel %vm688, %v566, %v594
        %v820 = vsel %vm688, %v568, %v596
        %v823 = vsel %vm688, %v570, %v598
        %v826 = vsel %vm688, %v572, %v600
        %v829 = vsel %vm688, %v574, %v602
        %v832 = vsel %vm688, %v576, %v604
        %v835 = vsel %vm688, %v578, %v606
        %v838 = vsel %vm688, %v580, %v608
        %v841 = vsel %vm688, %v582, %v610
        %v844 = vsel %vm688, %v584, %v612
        %v846 = vsel %vm731, %v805, %v487
        %v848 = vsel %vm731, %v808, %v488
        %v850 = vsel %vm731, %v811, %v489
        %v852 = vsel %vm731, %v814, %v490
        %v854 = vsel %vm731, %v817, %v491
        %v856 = vsel %vm731, %v820, %v492
        %v858 = vsel %vm731, %v823, %v493
        %v860 = vsel %vm731, %v826, %v494
        %v862 = vsel %vm731, %v829, %v495
        %v864 = vsel %vm731, %v832, %v496
        %v866 = vsel %vm731, %v835, %v497
        %v868 = vsel %vm731, %v838, %v498
        %v870 = vsel %vm731, %v841, %v614
        %v872 = vsel %vm731, %v844, %v622
        %v874 = vsel %vm760, %v846, %v633
        %v877 = vsel %vm760, %v848, %v635
        %v880 = vsel %vm760, %v850, %v637
        %v883 = vsel %vm760, %v852, %v639
        %v886 = vsel %vm760, %v854, %v641
        %v889 = vsel %vm760, %v856, %v643
        %v892 = vsel %vm760, %v858, %v645
        %v895 = vsel %vm760, %v860, %v647
        %v898 = vsel %vm760, %v862, %v649
        %v901 = vsel %vm760, %v864, %v651
        %v904 = vsel %vm760, %v866, %v653
        %v907 = vsel %vm760, %v868, %v655
        %v910 = vsel %vm760, %v870, %v657
        %v913 = vsel %vm760, %v872, %v659
        %v915 = vld [vmem:[%s1] sm:$0xf]
        %vm916 = vcmask 293888
        %v918 = vsel %vm916, %v915, 0
        %v921 = vsel %vm688, %v661, 0
        %923 = vmatprep.subr.bf16.mxu0 0
        %924 = vmatpush1.bf16.msra.mxu0 0
        %925 = vmatprep.subr.bf16.mxu0 0
        %926 = vmatpush1.bf16.msra.mxu0 0
        %927 = vmatprep.subr.bf16.mxu0 0
        %928 = vmatpush1.bf16.msra.mxu0 0
        %929 = vmatprep.subr.bf16.mxu0 0
        %930 = vmatpush1.bf16.msra.mxu0 0
        %931 = vmatprep.subr.bf16.mxu0 0
        %932 = vmatpush1.bf16.msra.mxu0 0
        %933 = vmatprep.subr.bf16.mxu0 0
        %934 = vmatpush1.bf16.msra.mxu0 %v921
        %935 = vmatprep.subr.bf16.mxu0 0
        %936 = vmatpush1.bf16.msra.mxu0 %v874
        %937 = vmatprep.subr.bf16.mxu0 0
        %938 = vmatpush1.bf16.msra.mxu0 %v762
        %939 = vmatprep.subr.bf16.mxu0 0
        %940 = vmatpush2.bf16.msra.mxu0 0
        %941 = vmatprep.subr.bf16.mxu0 0
        %942 = vmatpush2.bf16.msra.mxu0 0
        %943 = vmatprep.subr.bf16.mxu0 0
        %944 = vmatpush2.bf16.msra.mxu0 0
        %945 = vmatprep.subr.bf16.mxu0 0
        %946 = vmatpush2.bf16.msra.mxu0 0
        %947 = vmatprep.subr.bf16.mxu0 0
        %948 = vmatpush2.bf16.msra.mxu0 0
        %949 = vmatprep.subr.bf16.mxu0 0
        %950 = vmatpush2.bf16.msra.mxu0 0
        %951 = vmatprep.subr.bf16.mxu0 0
        %952 = vmatpush2.bf16.msra.mxu0 0
        %953 = vmatprep.subr.bf16.mxu0 0
        %954 = vmatpush2.bf16.msra.mxu0 0
        %955 = vmatprep.mubr.bf16.mxu0 0
        %956 = vmatmul.mubr.bf16.gmra.mxu0 %v918
        %v957 = vpop.f32.mrf.mxu0
        %v958 = vadd.f32 0.0, %v957
        %v959 = vpop.f32.mrf.mxu0
        %v960 = vpop.f32.mrf.mxu0
        %v961 = vpop.f32.mrf.mxu0
        %962 = vdwg.mxu0
        %v964 = vsel %vm688, %v663, 0
        %966 = vmatprep.subr.bf16.mxu0 0
        %967 = vmatpush1.bf16.msra.mxu0 0
        %968 = vmatprep.subr.bf16.mxu0 0
        %969 = vmatpush1.bf16.msra.mxu0 0
        %970 = vmatprep.subr.bf16.mxu0 0
        %971 = vmatpush1.bf16.msra.mxu0 0
        %972 = vmatprep.subr.bf16.mxu0 0
        %973 = vmatpush1.bf16.msra.mxu0 0
        %974 = vmatprep.subr.bf16.mxu0 0
        %975 = vmatpush1.bf16.msra.mxu0 0
        %976 = vmatprep.subr.bf16.mxu0 0
        %977 = vmatpush1.bf16.msra.mxu0 %v964
        %978 = vmatprep.subr.bf16.mxu0 0
        %979 = vmatpush1.bf16.msra.mxu0 %v877
        %980 = vmatprep.subr.bf16.mxu0 0
        %981 = vmatpush1.bf16.msra.mxu0 %v765
        %982 = vmatprep.subr.bf16.mxu0 0
        %983 = vmatpush2.bf16.msra.mxu0 0
        %984 = vmatprep.subr.bf16.mxu0 0
        %985 = vmatpush2.bf16.msra.mxu0 0
        %986 = vmatprep.subr.bf16.mxu0 0
        %987 = vmatpush2.bf16.msra.mxu0 0
        %988 = vmatprep.subr.bf16.mxu0 0
        %989 = vmatpush2.bf16.msra.mxu0 0
        %990 = vmatprep.subr.bf16.mxu0 0
        %991 = vmatpush2.bf16.msra.mxu0 0
        %992 = vmatprep.subr.bf16.mxu0 0
        %993 = vmatpush2.bf16.msra.mxu0 0
        %994 = vmatprep.subr.bf16.mxu0 0
        %995 = vmatpush2.bf16.msra.mxu0 0
        %996 = vmatprep.subr.bf16.mxu0 0
        %997 = vmatpush2.bf16.msra.mxu0 0
        %998 = vmatprep.mubr.bf16.mxu0 0
        %999 = vmatmul.mubr.bf16.gmra.mxu0 %v918
        %v1000 = vpop.f32.mrf.mxu0
        %v1001 = vadd.f32 0.0, %v1000
        %v1002 = vpop.f32.mrf.mxu0
        %v1003 = vpop.f32.mrf.mxu0
        %v1004 = vpop.f32.mrf.mxu0
        %1005 = vdwg.mxu0
        %v1007 = vsel %vm688, %v665, 0
        %1009 = vmatprep.subr.bf16.mxu0 0
        %1010 = vmatpush1.bf16.msra.mxu0 0
        %1011 = vmatprep.subr.bf16.mxu0 0
        %1012 = vmatpush1.bf16.msra.mxu0 0
        %1013 = vmatprep.subr.bf16.mxu0 0
        %1014 = vmatpush1.bf16.msra.mxu0 0
        %1015 = vmatprep.subr.bf16.mxu0 0
        %1016 = vmatpush1.bf16.msra.mxu0 0
        %1017 = vmatprep.subr.bf16.mxu0 0
        %1018 = vmatpush1.bf16.msra.mxu0 0
        %1019 = vmatprep.subr.bf16.mxu0 0
        %1020 = vmatpush1.bf16.msra.mxu0 %v1007
        %1021 = vmatprep.subr.bf16.mxu0 0
        %1022 = vmatpush1.bf16.msra.mxu0 %v880
        %1023 = vmatprep.subr.bf16.mxu0 0
        %1024 = vmatpush1.bf16.msra.mxu0 %v768
        %1025 = vmatprep.subr.bf16.mxu0 0
        %1026 = vmatpush2.bf16.msra.mxu0 0
        %1027 = vmatprep.subr.bf16.mxu0 0
        %1028 = vmatpush2.bf16.msra.mxu0 0
        %1029 = vmatprep.subr.bf16.mxu0 0
        %1030 = vmatpush2.bf16.msra.mxu0 0
        %1031 = vmatprep.subr.bf16.mxu0 0
        %1032 = vmatpush2.bf16.msra.mxu0 0
        %1033 = vmatprep.subr.bf16.mxu0 0
        %1034 = vmatpush2.bf16.msra.mxu0 0
        %1035 = vmatprep.subr.bf16.mxu0 0
        %1036 = vmatpush2.bf16.msra.mxu0 0
        %1037 = vmatprep.subr.bf16.mxu0 0
        %1038 = vmatpush2.bf16.msra.mxu0 0
        %1039 = vmatprep.subr.bf16.mxu0 0
        %1040 = vmatpush2.bf16.msra.mxu0 0
        %1041 = vmatprep.mubr.bf16.mxu0 0
        %1042 = vmatmul.mubr.bf16.gmra.mxu0 %v918
        %v1043 = vpop.f32.mrf.mxu0
        %v1044 = vadd.f32 0.0, %v1043
        %v1045 = vpop.f32.mrf.mxu0
        %v1046 = vpop.f32.mrf.mxu0
        %v1047 = vpop.f32.mrf.mxu0
        %1048 = vdwg.mxu0
        %v1050 = vsel %vm688, %v667, 0
        %1052 = vmatprep.subr.bf16.mxu0 0
        %1053 = vmatpush1.bf16.msra.mxu0 0
        %1054 = vmatprep.subr.bf16.mxu0 0
        %1055 = vmatpush1.bf16.msra.mxu0 0
        %1056 = vmatprep.subr.bf16.mxu0 0
        %1057 = vmatpush1.bf16.msra.mxu0 0
        %1058 = vmatprep.subr.bf16.mxu0 0
        %1059 = vmatpush1.bf16.msra.mxu0 0
        %1060 = vmatprep.subr.bf16.mxu0 0
        %1061 = vmatpush1.bf16.msra.mxu0 0
        %1062 = vmatprep.subr.bf16.mxu0 0
        %1063 = vmatpush1.bf16.msra.mxu0 %v1050
        %1064 = vmatprep.subr.bf16.mxu0 0
        %1065 = vmatpush1.bf16.msra.mxu0 %v883
        %1066 = vmatprep.subr.bf16.mxu0 0
        %1067 = vmatpush1.bf16.msra.mxu0 %v771
        %1068 = vmatprep.subr.bf16.mxu0 0
        %1069 = vmatpush2.bf16.msra.mxu0 0
        %1070 = vmatprep.subr.bf16.mxu0 0
        %1071 = vmatpush2.bf16.msra.mxu0 0
        %1072 = vmatprep.subr.bf16.mxu0 0
        %1073 = vmatpush2.bf16.msra.mxu0 0
        %1074 = vmatprep.subr.bf16.mxu0 0
        %1075 = vmatpush2.bf16.msra.mxu0 0
        %1076 = vmatprep.subr.bf16.mxu0 0
        %1077 = vmatpush2.bf16.msra.mxu0 0
        %1078 = vmatprep.subr.bf16.mxu0 0
        %1079 = vmatpush2.bf16.msra.mxu0 0
        %1080 = vmatprep.subr.bf16.mxu0 0
        %1081 = vmatpush2.bf16.msra.mxu0 0
        %1082 = vmatprep.subr.bf16.mxu0 0
        %1083 = vmatpush2.bf16.msra.mxu0 0
        %1084 = vmatprep.mubr.bf16.mxu0 0
        %1085 = vmatmul.mubr.bf16.gmra.mxu0 %v918
        %v1086 = vpop.f32.mrf.mxu0
        %v1087 = vadd.f32 0.0, %v1086
        %v1088 = vpop.f32.mrf.mxu0
        %v1089 = vpop.f32.mrf.mxu0
        %v1090 = vpop.f32.mrf.mxu0
        %1091 = vdwg.mxu0
        %v1093 = vsel %vm688, %v669, 0
        %1095 = vmatprep.subr.bf16.mxu0 0
        %1096 = vmatpush1.bf16.msra.mxu0 0
        %1097 = vmatprep.subr.bf16.mxu0 0
        %1098 = vmatpush1.bf16.msra.mxu0 0
        %1099 = vmatprep.subr.bf16.mxu0 0
        %1100 = vmatpush1.bf16.msra.mxu0 0
        %1101 = vmatprep.subr.bf16.mxu0 0
        %1102 = vmatpush1.bf16.msra.mxu0 0
        %1103 = vmatprep.subr.bf16.mxu0 0
        %1104 = vmatpush1.bf16.msra.mxu0 0
        %1105 = vmatprep.subr.bf16.mxu0 0
        %1106 = vmatpush1.bf16.msra.mxu0 %v1093
        %1107 = vmatprep.subr.bf16.mxu0 0
        %1108 = vmatpush1.bf16.msra.mxu0 %v886
        %1109 = vmatprep.subr.bf16.mxu0 0
        %1110 = vmatpush1.bf16.msra.mxu0 %v774
        %1111 = vmatprep.subr.bf16.mxu0 0
        %1112 = vmatpush2.bf16.msra.mxu0 0
        %1113 = vmatprep.subr.bf16.mxu0 0
        %1114 = vmatpush2.bf16.msra.mxu0 0
        %1115 = vmatprep.subr.bf16.mxu0 0
        %1116 = vmatpush2.bf16.msra.mxu0 0
        %1117 = vmatprep.subr.bf16.mxu0 0
        %1118 = vmatpush2.bf16.msra.mxu0 0
        %1119 = vmatprep.subr.bf16.mxu0 0
        %1120 = vmatpush2.bf16.msra.mxu0 0
        %1121 = vmatprep.subr.bf16.mxu0 0
        %1122 = vmatpush2.bf16.msra.mxu0 0
        %1123 = vmatprep.subr.bf16.mxu0 0
        %1124 = vmatpush2.bf16.msra.mxu0 0
        %1125 = vmatprep.subr.bf16.mxu0 0
        %1126 = vmatpush2.bf16.msra.mxu0 0
        %1127 = vmatprep.mubr.bf16.mxu0 0
        %1128 = vmatmul.mubr.bf16.gmra.mxu0 %v918
        %v1129 = vpop.f32.mrf.mxu0
        %v1130 = vadd.f32 0.0, %v1129
        %v1131 = vpop.f32.mrf.mxu0
        %v1132 = vpop.f32.mrf.mxu0
        %v1133 = vpop.f32.mrf.mxu0
        %1134 = vdwg.mxu0
        %v1136 = vsel %vm688, %v671, 0
        %1138 = vmatprep.subr.bf16.mxu0 0
        %1139 = vmatpush1.bf16.msra.mxu0 0
        %1140 = vmatprep.subr.bf16.mxu0 0
        %1141 = vmatpush1.bf16.msra.mxu0 0
        %1142 = vmatprep.subr.bf16.mxu0 0
        %1143 = vmatpush1.bf16.msra.mxu0 0
        %1144 = vmatprep.subr.bf16.mxu0 0
        %1145 = vmatpush1.bf16.msra.mxu0 0
        %1146 = vmatprep.subr.bf16.mxu0 0
        %1147 = vmatpush1.bf16.msra.mxu0 0
        %1148 = vmatprep.subr.bf16.mxu0 0
        %1149 = vmatpush1.bf16.msra.mxu0 %v1136
        %1150 = vmatprep.subr.bf16.mxu0 0
        %1151 = vmatpush1.bf16.msra.mxu0 %v889
        %1152 = vmatprep.subr.bf16.mxu0 0
        %1153 = vmatpush1.bf16.msra.mxu0 %v777
        %1154 = vmatprep.subr.bf16.mxu0 0
        %1155 = vmatpush2.bf16.msra.mxu0 0
        %1156 = vmatprep.subr.bf16.mxu0 0
        %1157 = vmatpush2.bf16.msra.mxu0 0
        %1158 = vmatprep.subr.bf16.mxu0 0
        %1159 = vmatpush2.bf16.msra.mxu0 0
        %1160 = vmatprep.subr.bf16.mxu0 0
        %1161 = vmatpush2.bf16.msra.mxu0 0
        %1162 = vmatprep.subr.bf16.mxu0 0
        %1163 = vmatpush2.bf16.msra.mxu0 0
        %1164 = vmatprep.subr.bf16.mxu0 0
        %1165 = vmatpush2.bf16.msra.mxu0 0
        %1166 = vmatprep.subr.bf16.mxu0 0
        %1167 = vmatpush2.bf16.msra.mxu0 0
        %1168 = vmatprep.subr.bf16.mxu0 0
        %1169 = vmatpush2.bf16.msra.mxu0 0
        %1170 = vmatprep.mubr.bf16.mxu0 0
        %1171 = vmatmul.mubr.bf16.gmra.mxu0 %v918
        %v1172 = vpop.f32.mrf.mxu0
        %v1173 = vadd.f32 0.0, %v1172
        %v1174 = vpop.f32.mrf.mxu0
        %v1175 = vpop.f32.mrf.mxu0
        %v1176 = vpop.f32.mrf.mxu0
        %1177 = vdwg.mxu0
        %v1179 = vsel %vm688, %v673, 0
        %1181 = vmatprep.subr.bf16.mxu0 0
        %1182 = vmatpush1.bf16.msra.mxu0 0
        %1183 = vmatprep.subr.bf16.mxu0 0
        %1184 = vmatpush1.bf16.msra.mxu0 0
        %1185 = vmatprep.subr.bf16.mxu0 0
        %1186 = vmatpush1.bf16.msra.mxu0 0
        %1187 = vmatprep.subr.bf16.mxu0 0
        %1188 = vmatpush1.bf16.msra.mxu0 0
        %1189 = vmatprep.subr.bf16.mxu0 0
        %1190 = vmatpush1.bf16.msra.mxu0 0
        %1191 = vmatprep.subr.bf16.mxu0 0
        %1192 = vmatpush1.bf16.msra.mxu0 %v1179
        %1193 = vmatprep.subr.bf16.mxu0 0
        %1194 = vmatpush1.bf16.msra.mxu0 %v892
        %1195 = vmatprep.subr.bf16.mxu0 0
        %1196 = vmatpush1.bf16.msra.mxu0 %v780
        %1197 = vmatprep.subr.bf16.mxu0 0
        %1198 = vmatpush2.bf16.msra.mxu0 0
        %1199 = vmatprep.subr.bf16.mxu0 0
        %1200 = vmatpush2.bf16.msra.mxu0 0
        %1201 = vmatprep.subr.bf16.mxu0 0
        %1202 = vmatpush2.bf16.msra.mxu0 0
        %1203 = vmatprep.subr.bf16.mxu0 0
        %1204 = vmatpush2.bf16.msra.mxu0 0
        %1205 = vmatprep.subr.bf16.mxu0 0
        %1206 = vmatpush2.bf16.msra.mxu0 0
        %1207 = vmatprep.subr.bf16.mxu0 0
        %1208 = vmatpush2.bf16.msra.mxu0 0
        %1209 = vmatprep.subr.bf16.mxu0 0
        %1210 = vmatpush2.bf16.msra.mxu0 0
        %1211 = vmatprep.subr.bf16.mxu0 0
        %1212 = vmatpush2.bf16.msra.mxu0 0
        %1213 = vmatprep.mubr.bf16.mxu0 0
        %1214 = vmatmul.mubr.bf16.gmra.mxu0 %v918
        %v1215 = vpop.f32.mrf.mxu0
        %v1216 = vadd.f32 0.0, %v1215
        %v1217 = vpop.f32.mrf.mxu0
        %v1218 = vpop.f32.mrf.mxu0
        %v1219 = vpop.f32.mrf.mxu0
        %1220 = vdwg.mxu0
        %v1222 = vsel %vm688, %v675, 0
        %1224 = vmatprep.subr.bf16.mxu0 0
        %1225 = vmatpush1.bf16.msra.mxu0 0
        %1226 = vmatprep.subr.bf16.mxu0 0
        %1227 = vmatpush1.bf16.msra.mxu0 0
        %1228 = vmatprep.subr.bf16.mxu0 0
        %1229 = vmatpush1.bf16.msra.mxu0 0
        %1230 = vmatprep.subr.bf16.mxu0 0
        %1231 = vmatpush1.bf16.msra.mxu0 0
        %1232 = vmatprep.subr.bf16.mxu0 0
        %1233 = vmatpush1.bf16.msra.mxu0 0
        %1234 = vmatprep.subr.bf16.mxu0 0
        %1235 = vmatpush1.bf16.msra.mxu0 %v1222
        %1236 = vmatprep.subr.bf16.mxu0 0
        %1237 = vmatpush1.bf16.msra.mxu0 %v895
        %1238 = vmatprep.subr.bf16.mxu0 0
        %1239 = vmatpush1.bf16.msra.mxu0 %v783
        %1240 = vmatprep.subr.bf16.mxu0 0
        %1241 = vmatpush2.bf16.msra.mxu0 0
        %1242 = vmatprep.subr.bf16.mxu0 0
        %1243 = vmatpush2.bf16.msra.mxu0 0
        %1244 = vmatprep.subr.bf16.mxu0 0
        %1245 = vmatpush2.bf16.msra.mxu0 0
        %1246 = vmatprep.subr.bf16.mxu0 0
        %1247 = vmatpush2.bf16.msra.mxu0 0
        %1248 = vmatprep.subr.bf16.mxu0 0
        %1249 = vmatpush2.bf16.msra.mxu0 0
        %1250 = vmatprep.subr.bf16.mxu0 0
        %1251 = vmatpush2.bf16.msra.mxu0 0
        %1252 = vmatprep.subr.bf16.mxu0 0
        %1253 = vmatpush2.bf16.msra.mxu0 0
        %1254 = vmatprep.subr.bf16.mxu0 0
        %1255 = vmatpush2.bf16.msra.mxu0 0
        %1256 = vmatprep.mubr.bf16.mxu0 0
        %1257 = vmatmul.mubr.bf16.gmra.mxu0 %v918
        %v1258 = vpop.f32.mrf.mxu0
        %v1259 = vadd.f32 0.0, %v1258
        %v1260 = vpop.f32.mrf.mxu0
        %v1261 = vpop.f32.mrf.mxu0
        %v1262 = vpop.f32.mrf.mxu0
        %1263 = vdwg.mxu0
        %v1265 = vsel %vm688, %v677, 0
        %1267 = vmatprep.subr.bf16.mxu0 0
        %1268 = vmatpush1.bf16.msra.mxu0 0
        %1269 = vmatprep.subr.bf16.mxu0 0
        %1270 = vmatpush1.bf16.msra.mxu0 0
        %1271 = vmatprep.subr.bf16.mxu0 0
        %1272 = vmatpush1.bf16.msra.mxu0 0
        %1273 = vmatprep.subr.bf16.mxu0 0
        %1274 = vmatpush1.bf16.msra.mxu0 0
        %1275 = vmatprep.subr.bf16.mxu0 0
        %1276 = vmatpush1.bf16.msra.mxu0 0
        %1277 = vmatprep.subr.bf16.mxu0 0
        %1278 = vmatpush1.bf16.msra.mxu0 %v1265
        %1279 = vmatprep.subr.bf16.mxu0 0
        %1280 = vmatpush1.bf16.msra.mxu0 %v898
        %1281 = vmatprep.subr.bf16.mxu0 0
        %1282 = vmatpush1.bf16.msra.mxu0 %v786
        %1283 = vmatprep.subr.bf16.mxu0 0
        %1284 = vmatpush2.bf16.msra.mxu0 0
        %1285 = vmatprep.subr.bf16.mxu0 0
        %1286 = vmatpush2.bf16.msra.mxu0 0
        %1287 = vmatprep.subr.bf16.mxu0 0
        %1288 = vmatpush2.bf16.msra.mxu0 0
        %1289 = vmatprep.subr.bf16.mxu0 0
        %1290 = vmatpush2.bf16.msra.mxu0 0
        %1291 = vmatprep.subr.bf16.mxu0 0
        %1292 = vmatpush2.bf16.msra.mxu0 0
        %1293 = vmatprep.subr.bf16.mxu0 0
        %1294 = vmatpush2.bf16.msra.mxu0 0
        %1295 = vmatprep.subr.bf16.mxu0 0
        %1296 = vmatpush2.bf16.msra.mxu0 0
        %1297 = vmatprep.subr.bf16.mxu0 0
        %1298 = vmatpush2.bf16.msra.mxu0 0
        %1299 = vmatprep.mubr.bf16.mxu0 0
        %1300 = vmatmul.mubr.bf16.gmra.mxu0 %v918
        %v1301 = vpop.f32.mrf.mxu0
        %v1302 = vadd.f32 0.0, %v1301
        %v1303 = vpop.f32.mrf.mxu0
        %v1304 = vpop.f32.mrf.mxu0
        %v1305 = vpop.f32.mrf.mxu0
        %1306 = vdwg.mxu0
        %v1308 = vsel %vm688, %v679, 0
        %1310 = vmatprep.subr.bf16.mxu0 0
        %1311 = vmatpush1.bf16.msra.mxu0 0
        %1312 = vmatprep.subr.bf16.mxu0 0
        %1313 = vmatpush1.bf16.msra.mxu0 0
        %1314 = vmatprep.subr.bf16.mxu0 0
        %1315 = vmatpush1.bf16.msra.mxu0 0
        %1316 = vmatprep.subr.bf16.mxu0 0
        %1317 = vmatpush1.bf16.msra.mxu0 0
        %1318 = vmatprep.subr.bf16.mxu0 0
        %1319 = vmatpush1.bf16.msra.mxu0 0
        %1320 = vmatprep.subr.bf16.mxu0 0
        %1321 = vmatpush1.bf16.msra.mxu0 %v1308
        %1322 = vmatprep.subr.bf16.mxu0 0
        %1323 = vmatpush1.bf16.msra.mxu0 %v901
        %1324 = vmatprep.subr.bf16.mxu0 0
        %1325 = vmatpush1.bf16.msra.mxu0 %v789
        %1326 = vmatprep.subr.bf16.mxu0 0
        %1327 = vmatpush2.bf16.msra.mxu0 0
        %1328 = vmatprep.subr.bf16.mxu0 0
        %1329 = vmatpush2.bf16.msra.mxu0 0
        %1330 = vmatprep.subr.bf16.mxu0 0
        %1331 = vmatpush2.bf16.msra.mxu0 0
        %1332 = vmatprep.subr.bf16.mxu0 0
        %1333 = vmatpush2.bf16.msra.mxu0 0
        %1334 = vmatprep.subr.bf16.mxu0 0
        %1335 = vmatpush2.bf16.msra.mxu0 0
        %1336 = vmatprep.subr.bf16.mxu0 0
        %1337 = vmatpush2.bf16.msra.mxu0 0
        %1338 = vmatprep.subr.bf16.mxu0 0
        %1339 = vmatpush2.bf16.msra.mxu0 0
        %1340 = vmatprep.subr.bf16.mxu0 0
        %1341 = vmatpush2.bf16.msra.mxu0 0
        %1342 = vmatprep.mubr.bf16.mxu0 0
        %1343 = vmatmul.mubr.bf16.gmra.mxu0 %v918
        %v1344 = vpop.f32.mrf.mxu0
        %v1345 = vadd.f32 0.0, %v1344
        %v1346 = vpop.f32.mrf.mxu0
        %v1347 = vpop.f32.mrf.mxu0
        %v1348 = vpop.f32.mrf.mxu0
        %1349 = vdwg.mxu0
        %v1351 = vsel %vm688, %v681, 0
        %1353 = vmatprep.subr.bf16.mxu0 0
        %1354 = vmatpush1.bf16.msra.mxu0 0
        %1355 = vmatprep.subr.bf16.mxu0 0
        %1356 = vmatpush1.bf16.msra.mxu0 0
        %1357 = vmatprep.subr.bf16.mxu0 0
        %1358 = vmatpush1.bf16.msra.mxu0 0
        %1359 = vmatprep.subr.bf16.mxu0 0
        %1360 = vmatpush1.bf16.msra.mxu0 0
        %1361 = vmatprep.subr.bf16.mxu0 0
        %1362 = vmatpush1.bf16.msra.mxu0 0
        %1363 = vmatprep.subr.bf16.mxu0 0
        %1364 = vmatpush1.bf16.msra.mxu0 %v1351
        %1365 = vmatprep.subr.bf16.mxu0 0
        %1366 = vmatpush1.bf16.msra.mxu0 %v904
        %1367 = vmatprep.subr.bf16.mxu0 0
        %1368 = vmatpush1.bf16.msra.mxu0 %v792
        %1369 = vmatprep.subr.bf16.mxu0 0
        %1370 = vmatpush2.bf16.msra.mxu0 0
        %1371 = vmatprep.subr.bf16.mxu0 0
        %1372 = vmatpush2.bf16.msra.mxu0 0
        %1373 = vmatprep.subr.bf16.mxu0 0
        %1374 = vmatpush2.bf16.msra.mxu0 0
        %1375 = vmatprep.subr.bf16.mxu0 0
        %1376 = vmatpush2.bf16.msra.mxu0 0
        %1377 = vmatprep.subr.bf16.mxu0 0
        %1378 = vmatpush2.bf16.msra.mxu0 0
        %1379 = vmatprep.subr.bf16.mxu0 0
        %1380 = vmatpush2.bf16.msra.mxu0 0
        %1381 = vmatprep.subr.bf16.mxu0 0
        %1382 = vmatpush2.bf16.msra.mxu0 0
        %1383 = vmatprep.subr.bf16.mxu0 0
        %1384 = vmatpush2.bf16.msra.mxu0 0
        %1385 = vmatprep.mubr.bf16.mxu0 0
        %1386 = vmatmul.mubr.bf16.gmra.mxu0 %v918
        %v1387 = vpop.f32.mrf.mxu0
        %v1388 = vadd.f32 0.0, %v1387
        %v1389 = vpop.f32.mrf.mxu0
        %v1390 = vpop.f32.mrf.mxu0
        %v1391 = vpop.f32.mrf.mxu0
        %1392 = vdwg.mxu0
        %v1394 = vsel %vm688, %v683, 0
        %1396 = vmatprep.subr.bf16.mxu0 0
        %1397 = vmatpush1.bf16.msra.mxu0 0
        %1398 = vmatprep.subr.bf16.mxu0 0
        %1399 = vmatpush1.bf16.msra.mxu0 0
        %1400 = vmatprep.subr.bf16.mxu0 0
        %1401 = vmatpush1.bf16.msra.mxu0 0
        %1402 = vmatprep.subr.bf16.mxu0 0
        %1403 = vmatpush1.bf16.msra.mxu0 0
        %1404 = vmatprep.subr.bf16.mxu0 0
        %1405 = vmatpush1.bf16.msra.mxu0 0
        %1406 = vmatprep.subr.bf16.mxu0 0
        %1407 = vmatpush1.bf16.msra.mxu0 %v1394
        %1408 = vmatprep.subr.bf16.mxu0 0
        %1409 = vmatpush1.bf16.msra.mxu0 %v907
        %1410 = vmatprep.subr.bf16.mxu0 0
        %1411 = vmatpush1.bf16.msra.mxu0 %v795
        %1412 = vmatprep.subr.bf16.mxu0 0
        %1413 = vmatpush2.bf16.msra.mxu0 0
        %1414 = vmatprep.subr.bf16.mxu0 0
        %1415 = vmatpush2.bf16.msra.mxu0 0
        %1416 = vmatprep.subr.bf16.mxu0 0
        %1417 = vmatpush2.bf16.msra.mxu0 0
        %1418 = vmatprep.subr.bf16.mxu0 0
        %1419 = vmatpush2.bf16.msra.mxu0 0
        %1420 = vmatprep.subr.bf16.mxu0 0
        %1421 = vmatpush2.bf16.msra.mxu0 0
        %1422 = vmatprep.subr.bf16.mxu0 0
        %1423 = vmatpush2.bf16.msra.mxu0 0
        %1424 = vmatprep.subr.bf16.mxu0 0
        %1425 = vmatpush2.bf16.msra.mxu0 0
        %1426 = vmatprep.subr.bf16.mxu0 0
        %1427 = vmatpush2.bf16.msra.mxu0 0
        %1428 = vmatprep.mubr.bf16.mxu0 0
        %1429 = vmatmul.mubr.bf16.gmra.mxu0 %v918
        %v1430 = vpop.f32.mrf.mxu0
        %v1431 = vadd.f32 0.0, %v1430
        %v1432 = vpop.f32.mrf.mxu0
        %v1433 = vpop.f32.mrf.mxu0
        %v1434 = vpop.f32.mrf.mxu0
        %1435 = vdwg.mxu0
        %v1437 = vsel %vm688, %v685, 0
        %1439 = vmatprep.subr.bf16.mxu0 0
        %1440 = vmatpush1.bf16.msra.mxu0 0
        %1441 = vmatprep.subr.bf16.mxu0 0
        %1442 = vmatpush1.bf16.msra.mxu0 0
        %1443 = vmatprep.subr.bf16.mxu0 0
        %1444 = vmatpush1.bf16.msra.mxu0 0
        %1445 = vmatprep.subr.bf16.mxu0 0
        %1446 = vmatpush1.bf16.msra.mxu0 0
        %1447 = vmatprep.subr.bf16.mxu0 0
        %1448 = vmatpush1.bf16.msra.mxu0 0
        %1449 = vmatprep.subr.bf16.mxu0 0
        %1450 = vmatpush1.bf16.msra.mxu0 %v1437
        %1451 = vmatprep.subr.bf16.mxu0 0
        %1452 = vmatpush1.bf16.msra.mxu0 %v910
        %1453 = vmatprep.subr.bf16.mxu0 0
        %1454 = vmatpush1.bf16.msra.mxu0 %v798
        %1455 = vmatprep.subr.bf16.mxu0 0
        %1456 = vmatpush2.bf16.msra.mxu0 0
        %1457 = vmatprep.subr.bf16.mxu0 0
        %1458 = vmatpush2.bf16.msra.mxu0 0
        %1459 = vmatprep.subr.bf16.mxu0 0
        %1460 = vmatpush2.bf16.msra.mxu0 0
        %1461 = vmatprep.subr.bf16.mxu0 0
        %1462 = vmatpush2.bf16.msra.mxu0 0
        %1463 = vmatprep.subr.bf16.mxu0 0
        %1464 = vmatpush2.bf16.msra.mxu0 0
        %1465 = vmatprep.subr.bf16.mxu0 0
        %1466 = vmatpush2.bf16.msra.mxu0 0
        %1467 = vmatprep.subr.bf16.mxu0 0
        %1468 = vmatpush2.bf16.msra.mxu0 0
        %1469 = vmatprep.subr.bf16.mxu0 0
        %1470 = vmatpush2.bf16.msra.mxu0 0
        %1471 = vmatprep.mubr.bf16.mxu0 0
        %1472 = vmatmul.mubr.bf16.gmra.mxu0 %v918
        %v1473 = vpop.f32.mrf.mxu0
        %v1474 = vadd.f32 0.0, %v1473
        %v1475 = vpop.f32.mrf.mxu0
        %v1476 = vpop.f32.mrf.mxu0
        %v1477 = vpop.f32.mrf.mxu0
        %1478 = vdwg.mxu0
        %v1480 = vsel %vm688, %v687, 0
        %1482 = vmatprep.subr.bf16.mxu0 0
        %1483 = vmatpush1.bf16.msra.mxu0 0
        %1484 = vmatprep.subr.bf16.mxu0 0
        %1485 = vmatpush1.bf16.msra.mxu0 0
        %1486 = vmatprep.subr.bf16.mxu0 0
        %1487 = vmatpush1.bf16.msra.mxu0 0
        %1488 = vmatprep.subr.bf16.mxu0 0
        %1489 = vmatpush1.bf16.msra.mxu0 0
        %1490 = vmatprep.subr.bf16.mxu0 0
        %1491 = vmatpush1.bf16.msra.mxu0 0
        %1492 = vmatprep.subr.bf16.mxu0 0
        %1493 = vmatpush1.bf16.msra.mxu0 %v1480
        %1494 = vmatprep.subr.bf16.mxu0 0
        %1495 = vmatpush1.bf16.msra.mxu0 %v913
        %1496 = vmatprep.subr.bf16.mxu0 0
        %1497 = vmatpush1.bf16.msra.mxu0 %v801
        %1498 = vmatprep.subr.bf16.mxu0 0
        %1499 = vmatpush2.bf16.msra.mxu0 0
        %1500 = vmatprep.subr.bf16.mxu0 0
        %1501 = vmatpush2.bf16.msra.mxu0 0
        %1502 = vmatprep.subr.bf16.mxu0 0
        %1503 = vmatpush2.bf16.msra.mxu0 0
        %1504 = vmatprep.subr.bf16.mxu0 0
        %1505 = vmatpush2.bf16.msra.mxu0 0
        %1506 = vmatprep.subr.bf16.mxu0 0
        %1507 = vmatpush2.bf16.msra.mxu0 0
        %1508 = vmatprep.subr.bf16.mxu0 0
        %1509 = vmatpush2.bf16.msra.mxu0 0
        %1510 = vmatprep.subr.bf16.mxu0 0
        %1511 = vmatpush2.bf16.msra.mxu0 0
        %1512 = vmatprep.subr.bf16.mxu0 0
        %1513 = vmatpush2.bf16.msra.mxu0 0
        %1514 = vmatprep.mubr.bf16.mxu0 0
        %1515 = vmatmul.mubr.bf16.gmra.mxu0 %v918
        %v1516 = vpop.f32.mrf.mxu0
        %v1517 = vadd.f32 0.0, %v1516
        %v1518 = vpop.f32.mrf.mxu0
        %v1519 = vpop.f32.mrf.mxu0
        %v1520 = vpop.f32.mrf.mxu0
        %1521 = vdwg.mxu0
        %vm1522 = vcmp.gt.f32.partialorder %v958, 0.0
        %vm1523 = vcmp.gt.f32.partialorder %v1001, 0.0
        %vm1524 = vcmp.gt.f32.partialorder %v1044, 0.0
        %vm1525 = vcmp.gt.f32.partialorder %v1087, 0.0
        %vm1526 = vcmp.gt.f32.partialorder %v1130, 0.0
        %vm1527 = vcmp.gt.f32.partialorder %v1173, 0.0
        %vm1528 = vcmp.gt.f32.partialorder %v1216, 0.0
        %vm1529 = vcmp.gt.f32.partialorder %v1259, 0.0
        %vm1530 = vcmp.gt.f32.partialorder %v1302, 0.0
        %vm1531 = vcmp.gt.f32.partialorder %v1345, 0.0
        %vm1532 = vcmp.gt.f32.partialorder %v1388, 0.0
        %vm1533 = vcmp.gt.f32.partialorder %v1431, 0.0
        %vm1534 = vcmp.gt.f32.partialorder %v1474, 0.0
        %vm1535 = vcmp.gt.f32.partialorder %v1517, 0.0
        %v1536 = vmul.f32 %v958, 0.2
        %v1537 = vmul.f32 %v1001, 0.2
        %v1538 = vmul.f32 %v1044, 0.2
        %v1539 = vmul.f32 %v1087, 0.2
        %v1540 = vmul.f32 %v1130, 0.2
        %v1541 = vmul.f32 %v1173, 0.2
        %v1542 = vmul.f32 %v1216, 0.2
        %v1543 = vmul.f32 %v1259, 0.2
        %v1544 = vmul.f32 %v1302, 0.2
        %v1545 = vmul.f32 %v1345, 0.2
        %v1546 = vmul.f32 %v1388, 0.2
        %v1547 = vmul.f32 %v1431, 0.2
        %v1548 = vmul.f32 %v1474, 0.2
        %v1549 = vmul.f32 %v1517, 0.2
        %v1550 = vsel %vm1522, %v958, %v1536
        %v1551 = vsel %vm1523, %v1001, %v1537
        %v1552 = vsel %vm1524, %v1044, %v1538
        %v1553 = vsel %vm1525, %v1087, %v1539
        %v1554 = vsel %vm1526, %v1130, %v1540
        %v1555 = vsel %vm1527, %v1173, %v1541
        %v1556 = vsel %vm1528, %v1216, %v1542
        %v1557 = vsel %vm1529, %v1259, %v1543
        %v1558 = vsel %vm1530, %v1302, %v1544
        %v1559 = vsel %vm1531, %v1345, %v1545
        %v1560 = vsel %vm1532, %v1388, %v1546
        %v1561 = vsel %vm1533, %v1431, %v1547
        %v1562 = vsel %vm1534, %v1474, %v1548
        %v1563 = vsel %vm1535, %v1517, %v1549
        %v1564 = vcombine.low %v1550, %v1552
        %v1565 = vcombine.high %v1550, %v1552
        %v1567 = vunpack.c.l.s4 1983009808
        %v1568 = vunpack.c.0.s8 %v1567
        %v1569 = vlaneseq
        %v1570 = vshrl.u32 %v1569, 7
        %v1571 = vsub.s32 %v1568, %v1570
        %v1572 = vrot.slane %v1564, %v1571
        %v1574 = vunpack.c.l.s4 1983009808
        %v1575 = vunpack.c.0.s8 %v1574
        %v1576 = vlaneseq
        %v1577 = vshrl.u32 %v1576, 7
        %v1578 = vsub.s32 %v1575, %v1577
        %v1579 = vrot.slane %v1565, %v1578
        %v1580 = vcombine.low %v1551, %v1553
        %v1581 = vcombine.high %v1551, %v1553
        %v1583 = vunpack.c.l.s4 1983009808
        %v1584 = vunpack.c.0.s8 %v1583
        %v1585 = vlaneseq
        %v1586 = vshrl.u32 %v1585, 7
        %v1587 = vsub.s32 %v1584, %v1586
        %v1588 = vrot.slane %v1580, %v1587
        %v1590 = vunpack.c.l.s4 1983009808
        %v1591 = vunpack.c.0.s8 %v1590
        %v1592 = vlaneseq
        %v1593 = vshrl.u32 %v1592, 7
        %v1594 = vsub.s32 %v1591, %v1593
        %v1595 = vrot.slane %v1581, %v1594
        %v1596 = vcombine.low %v1554, %v1556
        %v1597 = vcombine.high %v1554, %v1556
        %v1599 = vunpack.c.l.s4 1983009808
        %v1600 = vunpack.c.0.s8 %v1599
        %v1601 = vlaneseq
        %v1602 = vshrl.u32 %v1601, 7
        %v1603 = vsub.s32 %v1600, %v1602
        %v1604 = vrot.slane %v1596, %v1603
        %v1606 = vunpack.c.l.s4 1983009808
        %v1607 = vunpack.c.0.s8 %v1606
        %v1608 = vlaneseq
        %v1609 = vshrl.u32 %v1608, 7
        %v1610 = vsub.s32 %v1607, %v1609
        %v1611 = vrot.slane %v1597, %v1610
        %v1612 = vcombine.low %v1555, %v1557
        %v1613 = vcombine.high %v1555, %v1557
        %v1615 = vunpack.c.l.s4 1983009808
        %v1616 = vunpack.c.0.s8 %v1615
        %v1617 = vlaneseq
        %v1618 = vshrl.u32 %v1617, 7
        %v1619 = vsub.s32 %v1616, %v1618
        %v1620 = vrot.slane %v1612, %v1619
        %v1622 = vunpack.c.l.s4 1983009808
        %v1623 = vunpack.c.0.s8 %v1622
        %v1624 = vlaneseq
        %v1625 = vshrl.u32 %v1624, 7
        %v1626 = vsub.s32 %v1623, %v1625
        %v1627 = vrot.slane %v1613, %v1626
        %v1628 = vcombine.low %v1572, %v1588
        %v1629 = vcombine.high %v1572, %v1588
        %v1631 = vunpack.c.l.s4 1934713408
        %v1632 = vunpack.c.0.s8 %v1631
        %v1633 = vlaneseq
        %v1634 = vshrl.u32 %v1633, 7
        %v1635 = vsub.s32 %v1632, %v1634
        %v1636 = vrot.slane %v1628, %v1635
        %v1638 = vunpack.c.l.s4 1934713408
        %v1639 = vunpack.c.0.s8 %v1638
        %v1640 = vlaneseq
        %v1641 = vshrl.u32 %v1640, 7
        %v1642 = vsub.s32 %v1639, %v1641
        %v1643 = vrot.slane %v1629, %v1642
        %v1644 = vcombine.low %v1579, %v1595
        %v1645 = vcombine.high %v1579, %v1595
        %v1647 = vunpack.c.l.s4 1934713408
        %v1648 = vunpack.c.0.s8 %v1647
        %v1649 = vlaneseq
        %v1650 = vshrl.u32 %v1649, 7
        %v1651 = vsub.s32 %v1648, %v1650
        %v1652 = vrot.slane %v1644, %v1651
        %v1654 = vunpack.c.l.s4 1934713408
        %v1655 = vunpack.c.0.s8 %v1654
        %v1656 = vlaneseq
        %v1657 = vshrl.u32 %v1656, 7
        %v1658 = vsub.s32 %v1655, %v1657
        %v1659 = vrot.slane %v1645, %v1658
        %v1660 = vcombine.low %v1604, %v1620
        %v1661 = vcombine.high %v1604, %v1620
        %v1663 = vunpack.c.l.s4 1934713408
        %v1664 = vunpack.c.0.s8 %v1663
        %v1665 = vlaneseq
        %v1666 = vshrl.u32 %v1665, 7
        %v1667 = vsub.s32 %v1664, %v1666
        %v1668 = vrot.slane %v1660, %v1667
        %v1670 = vunpack.c.l.s4 1934713408
        %v1671 = vunpack.c.0.s8 %v1670
        %v1672 = vlaneseq
        %v1673 = vshrl.u32 %v1672, 7
        %v1674 = vsub.s32 %v1671, %v1673
        %v1675 = vrot.slane %v1661, %v1674
        %v1676 = vcombine.low %v1611, %v1627
        %v1677 = vcombine.high %v1611, %v1627
        %v1679 = vunpack.c.l.s4 1934713408
        %v1680 = vunpack.c.0.s8 %v1679
        %v1681 = vlaneseq
        %v1682 = vshrl.u32 %v1681, 7
        %v1683 = vsub.s32 %v1680, %v1682
        %v1684 = vrot.slane %v1676, %v1683
        %v1686 = vunpack.c.l.s4 1934713408
        %v1687 = vunpack.c.0.s8 %v1686
        %v1688 = vlaneseq
        %v1689 = vshrl.u32 %v1688, 7
        %v1690 = vsub.s32 %v1687, %v1689
        %v1691 = vrot.slane %v1677, %v1690
        %v1692 = vcombine.low %v1636, %v1668
        %v1693 = vcombine.high %v1636, %v1668
        %v1694 = vcombine.low %v1643, %v1675
        %v1695 = vcombine.high %v1643, %v1675
        %v1696 = vcombine.low %v1652, %v1684
        %v1697 = vcombine.high %v1652, %v1684
        %v1698 = vcombine.low %v1659, %v1691
        %v1699 = vcombine.high %v1659, %v1691
        %v1700 = vcombine.low %v1558, %v1560
        %v1701 = vcombine.high %v1558, %v1560
        %v1703 = vunpack.c.l.s4 1983009808
        %v1704 = vunpack.c.0.s8 %v1703
        %v1705 = vlaneseq
        %v1706 = vshrl.u32 %v1705, 7
        %v1707 = vsub.s32 %v1704, %v1706
        %v1708 = vrot.slane %v1700, %v1707
        %v1710 = vunpack.c.l.s4 1983009808
        %v1711 = vunpack.c.0.s8 %v1710
        %v1712 = vlaneseq
        %v1713 = vshrl.u32 %v1712, 7
        %v1714 = vsub.s32 %v1711, %v1713
        %v1715 = vrot.slane %v1701, %v1714
        %v1716 = vcombine.low %v1559, %v1561
        %v1717 = vcombine.high %v1559, %v1561
        %v1719 = vunpack.c.l.s4 1983009808
        %v1720 = vunpack.c.0.s8 %v1719
        %v1721 = vlaneseq
        %v1722 = vshrl.u32 %v1721, 7
        %v1723 = vsub.s32 %v1720, %v1722
        %v1724 = vrot.slane %v1716, %v1723
        %v1726 = vunpack.c.l.s4 1983009808
        %v1727 = vunpack.c.0.s8 %v1726
        %v1728 = vlaneseq
        %v1729 = vshrl.u32 %v1728, 7
        %v1730 = vsub.s32 %v1727, %v1729
        %v1731 = vrot.slane %v1717, %v1730
        %v1732 = vcombine.high %v1562, 0.0
        %v1734 = vunpack.c.l.s4 1983009808
        %v1735 = vunpack.c.0.s8 %v1734
        %v1736 = vlaneseq
        %v1737 = vshrl.u32 %v1736, 7
        %v1738 = vsub.s32 %v1735, %v1737
        %v1739 = vrot.slane %v1562, %v1738
        %v1741 = vunpack.c.l.s4 1983009808
        %v1742 = vunpack.c.0.s8 %v1741
        %v1743 = vlaneseq
        %v1744 = vshrl.u32 %v1743, 7
        %v1745 = vsub.s32 %v1742, %v1744
        %v1746 = vrot.slane %v1732, %v1745
        %v1747 = vcombine.high %v1563, 0.0
        %v1749 = vunpack.c.l.s4 1983009808
        %v1750 = vunpack.c.0.s8 %v1749
        %v1751 = vlaneseq
        %v1752 = vshrl.u32 %v1751, 7
        %v1753 = vsub.s32 %v1750, %v1752
        %v1754 = vrot.slane %v1563, %v1753
        %v1756 = vunpack.c.l.s4 1983009808
        %v1757 = vunpack.c.0.s8 %v1756
        %v1758 = vlaneseq
        %v1759 = vshrl.u32 %v1758, 7
        %v1760 = vsub.s32 %v1757, %v1759
        %v1761 = vrot.slane %v1747, %v1760
        %v1762 = vcombine.low %v1708, %v1724
        %v1763 = vcombine.high %v1708, %v1724
        %v1765 = vunpack.c.l.s4 1934713408
        %v1766 = vunpack.c.0.s8 %v1765
        %v1767 = vlaneseq
        %v1768 = vshrl.u32 %v1767, 7
        %v1769 = vsub.s32 %v1766, %v1768
        %v1770 = vrot.slane %v1762, %v1769
        %v1772 = vunpack.c.l.s4 1934713408
        %v1773 = vunpack.c.0.s8 %v1772
        %v1774 = vlaneseq
        %v1775 = vshrl.u32 %v1774, 7
        %v1776 = vsub.s32 %v1773, %v1775
        %v1777 = vrot.slane %v1763, %v1776
        %v1778 = vcombine.low %v1715, %v1731
        %v1779 = vcombine.high %v1715, %v1731
        %v1781 = vunpack.c.l.s4 1934713408
        %v1782 = vunpack.c.0.s8 %v1781
        %v1783 = vlaneseq
        %v1784 = vshrl.u32 %v1783, 7
        %v1785 = vsub.s32 %v1782, %v1784
        %v1786 = vrot.slane %v1778, %v1785
        %v1788 = vunpack.c.l.s4 1934713408
        %v1789 = vunpack.c.0.s8 %v1788
        %v1790 = vlaneseq
        %v1791 = vshrl.u32 %v1790, 7
        %v1792 = vsub.s32 %v1789, %v1791
        %v1793 = vrot.slane %v1779, %v1792
        %v1794 = vcombine.low %v1739, %v1754
        %v1795 = vcombine.high %v1739, %v1754
        %v1797 = vunpack.c.l.s4 1934713408
        %v1798 = vunpack.c.0.s8 %v1797
        %v1799 = vlaneseq
        %v1800 = vshrl.u32 %v1799, 7
        %v1801 = vsub.s32 %v1798, %v1800
        %v1802 = vrot.slane %v1794, %v1801
        %v1804 = vunpack.c.l.s4 1934713408
        %v1805 = vunpack.c.0.s8 %v1804
        %v1806 = vlaneseq
        %v1807 = vshrl.u32 %v1806, 7
        %v1808 = vsub.s32 %v1805, %v1807
        %v1809 = vrot.slane %v1795, %v1808
        %v1810 = vcombine.low %v1746, %v1761
        %v1811 = vcombine.high %v1746, %v1761
        %v1813 = vunpack.c.l.s4 1934713408
        %v1814 = vunpack.c.0.s8 %v1813
        %v1815 = vlaneseq
        %v1816 = vshrl.u32 %v1815, 7
        %v1817 = vsub.s32 %v1814, %v1816
        %v1818 = vrot.slane %v1810, %v1817
        %v1820 = vunpack.c.l.s4 1934713408
        %v1821 = vunpack.c.0.s8 %v1820
        %v1822 = vlaneseq
        %v1823 = vshrl.u32 %v1822, 7
        %v1824 = vsub.s32 %v1821, %v1823
        %v1825 = vrot.slane %v1811, %v1824
        %v1826 = vcombine.low %v1770, %v1802
        %v1827 = vcombine.high %v1770, %v1802
        %v1828 = vcombine.low %v1777, %v1809
        %v1829 = vcombine.high %v1777, %v1809
        %v1830 = vcombine.low %v1786, %v1818
        %v1831 = vcombine.high %v1786, %v1818
        %v1832 = vcombine.low %v1793, %v1825
        %v1833 = vcombine.high %v1793, %v1825
        %v1834 = vld [vmem:[%s2] sm:$0xff]
        %v1835 = vld [vmem:[%s2 + $0x8] sm:$0xff]
        %v1836 = vld [vmem:[%s2 + $0x10] sm:$0xff]
        %v1837 = vld [vmem:[%s2 + $0x18] sm:$0xff]
        %vm1838 = vcmask 113664
        %v1840 = vsel %vm1838, %v1834, 0
        %v1843 = vsel %vm1838, %v1835, 0
        %v1846 = vsel %vm1838, %v1836, 0
        %v1849 = vsel %vm1838, %v1837, 0
        %v1852 = vsel %vm760, %v1826, 0
        %1854 = vmatprep.subr.mxu0 0.0
        %1855 = vmatpush1.msra.mxu0 0.0
        %1856 = vmatprep.subr.mxu0 0.0
        %1857 = vmatpush1.msra.mxu0 0.0
        %1858 = vmatprep.subr.mxu0 0.0
        %1859 = vmatpush1.msra.mxu0 0.0
        %1860 = vmatprep.subr.mxu0 0.0
        %1861 = vmatpush1.msra.mxu0 0.0
        %1862 = vmatprep.subr.mxu0 0.0
        %1863 = vmatpush1.msra.mxu0 0.0
        %1864 = vmatprep.subr.mxu0 0.0
        %1865 = vmatpush1.msra.mxu0 0.0
        %1866 = vmatprep.subr.mxu0 0.0
        %1867 = vmatpush1.msra.mxu0 0.0
        %1868 = vmatprep.subr.mxu0 0.0
        %1869 = vmatpush1.msra.mxu0 0.0
        %1870 = vmatprep.subr.mxu0 0.0
        %1871 = vmatpush1.msra.mxu0 0.0
        %1872 = vmatprep.subr.mxu0 0.0
        %1873 = vmatpush1.msra.mxu0 0.0
        %1874 = vmatprep.subr.mxu0 0.0
        %1875 = vmatpush1.msra.mxu0 0.0
        %1876 = vmatprep.subr.mxu0 0.0
        %1877 = vmatpush1.msra.mxu0 0.0
        %1878 = vmatprep.subr.mxu0 0.0
        %1879 = vmatpush1.msra.mxu0 0.0
        %1880 = vmatprep.subr.mxu0 0.0
        %1881 = vmatpush1.msra.mxu0 0.0
        %1882 = vmatprep.subr.mxu0 0.0
        %1883 = vmatpush1.msra.mxu0 %v1852
        %1884 = vmatprep.subr.mxu0 0.0
        %1885 = vmatpush1.msra.mxu0 %v1692
        %1886 = vmatprep.subr.mxu0 0.0
        %1887 = vmatpush2.msra.mxu0 0.0
        %1888 = vmatprep.subr.mxu0 0.0
        %1889 = vmatpush2.msra.mxu0 0.0
        %1890 = vmatprep.subr.mxu0 0.0
        %1891 = vmatpush2.msra.mxu0 0.0
        %1892 = vmatprep.subr.mxu0 0.0
        %1893 = vmatpush2.msra.mxu0 0.0
        %1894 = vmatprep.subr.mxu0 0.0
        %1895 = vmatpush2.msra.mxu0 0.0
        %1896 = vmatprep.subr.mxu0 0.0
        %1897 = vmatpush2.msra.mxu0 0.0
        %1898 = vmatprep.subr.mxu0 0.0
        %1899 = vmatpush2.msra.mxu0 0.0
        %1900 = vmatprep.subr.mxu0 0.0
        %1901 = vmatpush2.msra.mxu0 0.0
        %1902 = vmatprep.subr.mxu0 0.0
        %1903 = vmatpush2.msra.mxu0 0.0
        %1904 = vmatprep.subr.mxu0 0.0
        %1905 = vmatpush2.msra.mxu0 0.0
        %1906 = vmatprep.subr.mxu0 0.0
        %1907 = vmatpush2.msra.mxu0 0.0
        %1908 = vmatprep.subr.mxu0 0.0
        %1909 = vmatpush2.msra.mxu0 0.0
        %1910 = vmatprep.subr.mxu0 0.0
        %1911 = vmatpush2.msra.mxu0 0.0
        %1912 = vmatprep.subr.mxu0 0.0
        %1913 = vmatpush2.msra.mxu0 0.0
        %1914 = vmatprep.subr.mxu0 0.0
        %1915 = vmatpush2.msra.mxu0 0.0
        %1916 = vmatprep.subr.mxu0 0.0
        %1917 = vmatpush2.msra.mxu0 0.0
        %1918 = vmatprep.mubr.f32.mxu0 0.0
        %1919 = vmatmul.mubr.f32.gmra.mxu0 %v1840
        %v1920 = vpop.f32.mrf.mxu0
        %v1921 = vadd.f32 0.0, %v1920
        %v1922 = vpop.f32.mrf.mxu0
        %1923 = vmatprep.mubr.f32.mxu0 0.0
        %1924 = vmatmul.mubr.f32.gmra.mxu0 %v1843
        %v1925 = vpop.f32.mrf.mxu0
        %v1926 = vadd.f32 0.0, %v1925
        %v1927 = vpop.f32.mrf.mxu0
        %1928 = vmatprep.mubr.f32.mxu0 0.0
        %1929 = vmatmul.mubr.f32.gmra.mxu0 %v1846
        %v1930 = vpop.f32.mrf.mxu0
        %v1931 = vadd.f32 0.0, %v1930
        %v1932 = vpop.f32.mrf.mxu0
        %1933 = vmatprep.mubr.f32.mxu0 0.0
        %1934 = vmatmul.mubr.f32.gmra.mxu0 %v1849
        %v1935 = vpop.f32.mrf.mxu0
        %v1936 = vadd.f32 0.0, %v1935
        %v1937 = vpop.f32.mrf.mxu0
        %1938 = vdwg.mxu0
        %v1940 = vsel %vm760, %v1827, 0
        %1942 = vmatprep.subr.mxu0 0.0
        %1943 = vmatpush1.msra.mxu0 0.0
        %1944 = vmatprep.subr.mxu0 0.0
        %1945 = vmatpush1.msra.mxu0 0.0
        %1946 = vmatprep.subr.mxu0 0.0
        %1947 = vmatpush1.msra.mxu0 0.0
        %1948 = vmatprep.subr.mxu0 0.0
        %1949 = vmatpush1.msra.mxu0 0.0
        %1950 = vmatprep.subr.mxu0 0.0
        %1951 = vmatpush1.msra.mxu0 0.0
        %1952 = vmatprep.subr.mxu0 0.0
        %1953 = vmatpush1.msra.mxu0 0.0
        %1954 = vmatprep.subr.mxu0 0.0
        %1955 = vmatpush1.msra.mxu0 0.0
        %1956 = vmatprep.subr.mxu0 0.0
        %1957 = vmatpush1.msra.mxu0 0.0
        %1958 = vmatprep.subr.mxu0 0.0
        %1959 = vmatpush1.msra.mxu0 0.0
        %1960 = vmatprep.subr.mxu0 0.0
        %1961 = vmatpush1.msra.mxu0 0.0
        %1962 = vmatprep.subr.mxu0 0.0
        %1963 = vmatpush1.msra.mxu0 0.0
        %1964 = vmatprep.subr.mxu0 0.0
        %1965 = vmatpush1.msra.mxu0 0.0
        %1966 = vmatprep.subr.mxu0 0.0
        %1967 = vmatpush1.msra.mxu0 0.0
        %1968 = vmatprep.subr.mxu0 0.0
        %1969 = vmatpush1.msra.mxu0 0.0
        %1970 = vmatprep.subr.mxu0 0.0
        %1971 = vmatpush1.msra.mxu0 %v1940
        %1972 = vmatprep.subr.mxu0 0.0
        %1973 = vmatpush1.msra.mxu0 %v1693
        %1974 = vmatprep.subr.mxu0 0.0
        %1975 = vmatpush2.msra.mxu0 0.0
        %1976 = vmatprep.subr.mxu0 0.0
        %1977 = vmatpush2.msra.mxu0 0.0
        %1978 = vmatprep.subr.mxu0 0.0
        %1979 = vmatpush2.msra.mxu0 0.0
        %1980 = vmatprep.subr.mxu0 0.0
        %1981 = vmatpush2.msra.mxu0 0.0
        %1982 = vmatprep.subr.mxu0 0.0
        %1983 = vmatpush2.msra.mxu0 0.0
        %1984 = vmatprep.subr.mxu0 0.0
        %1985 = vmatpush2.msra.mxu0 0.0
        %1986 = vmatprep.subr.mxu0 0.0
        %1987 = vmatpush2.msra.mxu0 0.0
        %1988 = vmatprep.subr.mxu0 0.0
        %1989 = vmatpush2.msra.mxu0 0.0
        %1990 = vmatprep.subr.mxu0 0.0
        %1991 = vmatpush2.msra.mxu0 0.0
        %1992 = vmatprep.subr.mxu0 0.0
        %1993 = vmatpush2.msra.mxu0 0.0
        %1994 = vmatprep.subr.mxu0 0.0
        %1995 = vmatpush2.msra.mxu0 0.0
        %1996 = vmatprep.subr.mxu0 0.0
        %1997 = vmatpush2.msra.mxu0 0.0
        %1998 = vmatprep.subr.mxu0 0.0
        %1999 = vmatpush2.msra.mxu0 0.0
        %2000 = vmatprep.subr.mxu0 0.0
        %2001 = vmatpush2.msra.mxu0 0.0
        %2002 = vmatprep.subr.mxu0 0.0
        %2003 = vmatpush2.msra.mxu0 0.0
        %2004 = vmatprep.subr.mxu0 0.0
        %2005 = vmatpush2.msra.mxu0 0.0
        %2006 = vmatprep.mubr.f32.mxu0 0.0
        %2007 = vmatmul.mubr.f32.gmra.mxu0 %v1840
        %v2008 = vpop.f32.mrf.mxu0
        %v2009 = vadd.f32 0.0, %v2008
        %v2010 = vpop.f32.mrf.mxu0
        %2011 = vmatprep.mubr.f32.mxu0 0.0
        %2012 = vmatmul.mubr.f32.gmra.mxu0 %v1843
        %v2013 = vpop.f32.mrf.mxu0
        %v2014 = vadd.f32 0.0, %v2013
        %v2015 = vpop.f32.mrf.mxu0
        %2016 = vmatprep.mubr.f32.mxu0 0.0
        %2017 = vmatmul.mubr.f32.gmra.mxu0 %v1846
        %v2018 = vpop.f32.mrf.mxu0
        %v2019 = vadd.f32 0.0, %v2018
        %v2020 = vpop.f32.mrf.mxu0
        %2021 = vmatprep.mubr.f32.mxu0 0.0
        %2022 = vmatmul.mubr.f32.gmra.mxu0 %v1849
        %v2023 = vpop.f32.mrf.mxu0
        %v2024 = vadd.f32 0.0, %v2023
        %v2025 = vpop.f32.mrf.mxu0
        %2026 = vdwg.mxu0
        %v2028 = vsel %vm760, %v1828, 0
        %2030 = vmatprep.subr.mxu0 0.0
        %2031 = vmatpush1.msra.mxu0 0.0
        %2032 = vmatprep.subr.mxu0 0.0
        %2033 = vmatpush1.msra.mxu0 0.0
        %2034 = vmatprep.subr.mxu0 0.0
        %2035 = vmatpush1.msra.mxu0 0.0
        %2036 = vmatprep.subr.mxu0 0.0
        %2037 = vmatpush1.msra.mxu0 0.0
        %2038 = vmatprep.subr.mxu0 0.0
        %2039 = vmatpush1.msra.mxu0 0.0
        %2040 = vmatprep.subr.mxu0 0.0
        %2041 = vmatpush1.msra.mxu0 0.0
        %2042 = vmatprep.subr.mxu0 0.0
        %2043 = vmatpush1.msra.mxu0 0.0
        %2044 = vmatprep.subr.mxu0 0.0
        %2045 = vmatpush1.msra.mxu0 0.0
        %2046 = vmatprep.subr.mxu0 0.0
        %2047 = vmatpush1.msra.mxu0 0.0
        %2048 = vmatprep.subr.mxu0 0.0
        %2049 = vmatpush1.msra.mxu0 0.0
        %2050 = vmatprep.subr.mxu0 0.0
        %2051 = vmatpush1.msra.mxu0 0.0
        %2052 = vmatprep.subr.mxu0 0.0
        %2053 = vmatpush1.msra.mxu0 0.0
        %2054 = vmatprep.subr.mxu0 0.0
        %2055 = vmatpush1.msra.mxu0 0.0
        %2056 = vmatprep.subr.mxu0 0.0
        %2057 = vmatpush1.msra.mxu0 0.0
        %2058 = vmatprep.subr.mxu0 0.0
        %2059 = vmatpush1.msra.mxu0 %v2028
        %2060 = vmatprep.subr.mxu0 0.0
        %2061 = vmatpush1.msra.mxu0 %v1694
        %2062 = vmatprep.subr.mxu0 0.0
        %2063 = vmatpush2.msra.mxu0 0.0
        %2064 = vmatprep.subr.mxu0 0.0
        %2065 = vmatpush2.msra.mxu0 0.0
        %2066 = vmatprep.subr.mxu0 0.0
        %2067 = vmatpush2.msra.mxu0 0.0
        %2068 = vmatprep.subr.mxu0 0.0
        %2069 = vmatpush2.msra.mxu0 0.0
        %2070 = vmatprep.subr.mxu0 0.0
        %2071 = vmatpush2.msra.mxu0 0.0
        %2072 = vmatprep.subr.mxu0 0.0
        %2073 = vmatpush2.msra.mxu0 0.0
        %2074 = vmatprep.subr.mxu0 0.0
        %2075 = vmatpush2.msra.mxu0 0.0
        %2076 = vmatprep.subr.mxu0 0.0
        %2077 = vmatpush2.msra.mxu0 0.0
        %2078 = vmatprep.subr.mxu0 0.0
        %2079 = vmatpush2.msra.mxu0 0.0
        %2080 = vmatprep.subr.mxu0 0.0
        %2081 = vmatpush2.msra.mxu0 0.0
        %2082 = vmatprep.subr.mxu0 0.0
        %2083 = vmatpush2.msra.mxu0 0.0
        %2084 = vmatprep.subr.mxu0 0.0
        %2085 = vmatpush2.msra.mxu0 0.0
        %2086 = vmatprep.subr.mxu0 0.0
        %2087 = vmatpush2.msra.mxu0 0.0
        %2088 = vmatprep.subr.mxu0 0.0
        %2089 = vmatpush2.msra.mxu0 0.0
        %2090 = vmatprep.subr.mxu0 0.0
        %2091 = vmatpush2.msra.mxu0 0.0
        %2092 = vmatprep.subr.mxu0 0.0
        %2093 = vmatpush2.msra.mxu0 0.0
        %2094 = vmatprep.mubr.f32.mxu0 0.0
        %2095 = vmatmul.mubr.f32.gmra.mxu0 %v1840
        %v2096 = vpop.f32.mrf.mxu0
        %v2097 = vadd.f32 0.0, %v2096
        %v2098 = vpop.f32.mrf.mxu0
        %2099 = vmatprep.mubr.f32.mxu0 0.0
        %2100 = vmatmul.mubr.f32.gmra.mxu0 %v1843
        %v2101 = vpop.f32.mrf.mxu0
        %v2102 = vadd.f32 0.0, %v2101
        %v2103 = vpop.f32.mrf.mxu0
        %2104 = vmatprep.mubr.f32.mxu0 0.0
        %2105 = vmatmul.mubr.f32.gmra.mxu0 %v1846
        %v2106 = vpop.f32.mrf.mxu0
        %v2107 = vadd.f32 0.0, %v2106
        %v2108 = vpop.f32.mrf.mxu0
        %2109 = vmatprep.mubr.f32.mxu0 0.0
        %2110 = vmatmul.mubr.f32.gmra.mxu0 %v1849
        %v2111 = vpop.f32.mrf.mxu0
        %v2112 = vadd.f32 0.0, %v2111
        %v2113 = vpop.f32.mrf.mxu0
        %2114 = vdwg.mxu0
        %v2116 = vsel %vm760, %v1829, 0
        %2118 = vmatprep.subr.mxu0 0.0
        %2119 = vmatpush1.msra.mxu0 0.0
        %2120 = vmatprep.subr.mxu0 0.0
        %2121 = vmatpush1.msra.mxu0 0.0
        %2122 = vmatprep.subr.mxu0 0.0
        %2123 = vmatpush1.msra.mxu0 0.0
        %2124 = vmatprep.subr.mxu0 0.0
        %2125 = vmatpush1.msra.mxu0 0.0
        %2126 = vmatprep.subr.mxu0 0.0
        %2127 = vmatpush1.msra.mxu0 0.0
        %2128 = vmatprep.subr.mxu0 0.0
        %2129 = vmatpush1.msra.mxu0 0.0
        %2130 = vmatprep.subr.mxu0 0.0
        %2131 = vmatpush1.msra.mxu0 0.0
        %2132 = vmatprep.subr.mxu0 0.0
        %2133 = vmatpush1.msra.mxu0 0.0
        %2134 = vmatprep.subr.mxu0 0.0
        %2135 = vmatpush1.msra.mxu0 0.0
        %2136 = vmatprep.subr.mxu0 0.0
        %2137 = vmatpush1.msra.mxu0 0.0
        %2138 = vmatprep.subr.mxu0 0.0
        %2139 = vmatpush1.msra.mxu0 0.0
        %2140 = vmatprep.subr.mxu0 0.0
        %2141 = vmatpush1.msra.mxu0 0.0
        %2142 = vmatprep.subr.mxu0 0.0
        %2143 = vmatpush1.msra.mxu0 0.0
        %2144 = vmatprep.subr.mxu0 0.0
        %2145 = vmatpush1.msra.mxu0 0.0
        %2146 = vmatprep.subr.mxu0 0.0
        %2147 = vmatpush1.msra.mxu0 %v2116
        %2148 = vmatprep.subr.mxu0 0.0
        %2149 = vmatpush1.msra.mxu0 %v1695
        %2150 = vmatprep.subr.mxu0 0.0
        %2151 = vmatpush2.msra.mxu0 0.0
        %2152 = vmatprep.subr.mxu0 0.0
        %2153 = vmatpush2.msra.mxu0 0.0
        %2154 = vmatprep.subr.mxu0 0.0
        %2155 = vmatpush2.msra.mxu0 0.0
        %2156 = vmatprep.subr.mxu0 0.0
        %2157 = vmatpush2.msra.mxu0 0.0
        %2158 = vmatprep.subr.mxu0 0.0
        %2159 = vmatpush2.msra.mxu0 0.0
        %2160 = vmatprep.subr.mxu0 0.0
        %2161 = vmatpush2.msra.mxu0 0.0
        %2162 = vmatprep.subr.mxu0 0.0
        %2163 = vmatpush2.msra.mxu0 0.0
        %2164 = vmatprep.subr.mxu0 0.0
        %2165 = vmatpush2.msra.mxu0 0.0
        %2166 = vmatprep.subr.mxu0 0.0
        %2167 = vmatpush2.msra.mxu0 0.0
        %2168 = vmatprep.subr.mxu0 0.0
        %2169 = vmatpush2.msra.mxu0 0.0
        %2170 = vmatprep.subr.mxu0 0.0
        %2171 = vmatpush2.msra.mxu0 0.0
        %2172 = vmatprep.subr.mxu0 0.0
        %2173 = vmatpush2.msra.mxu0 0.0
        %2174 = vmatprep.subr.mxu0 0.0
        %2175 = vmatpush2.msra.mxu0 0.0
        %2176 = vmatprep.subr.mxu0 0.0
        %2177 = vmatpush2.msra.mxu0 0.0
        %2178 = vmatprep.subr.mxu0 0.0
        %2179 = vmatpush2.msra.mxu0 0.0
        %2180 = vmatprep.subr.mxu0 0.0
        %2181 = vmatpush2.msra.mxu0 0.0
        %2182 = vmatprep.mubr.f32.mxu0 0.0
        %2183 = vmatmul.mubr.f32.gmra.mxu0 %v1840
        %v2184 = vpop.f32.mrf.mxu0
        %v2185 = vadd.f32 0.0, %v2184
        %v2186 = vpop.f32.mrf.mxu0
        %2187 = vmatprep.mubr.f32.mxu0 0.0
        %2188 = vmatmul.mubr.f32.gmra.mxu0 %v1843
        %v2189 = vpop.f32.mrf.mxu0
        %v2190 = vadd.f32 0.0, %v2189
        %v2191 = vpop.f32.mrf.mxu0
        %2192 = vmatprep.mubr.f32.mxu0 0.0
        %2193 = vmatmul.mubr.f32.gmra.mxu0 %v1846
        %v2194 = vpop.f32.mrf.mxu0
        %v2195 = vadd.f32 0.0, %v2194
        %v2196 = vpop.f32.mrf.mxu0
        %2197 = vmatprep.mubr.f32.mxu0 0.0
        %2198 = vmatmul.mubr.f32.gmra.mxu0 %v1849
        %v2199 = vpop.f32.mrf.mxu0
        %v2200 = vadd.f32 0.0, %v2199
        %v2201 = vpop.f32.mrf.mxu0
        %2202 = vdwg.mxu0
        %v2204 = vsel %vm760, %v1830, 0
        %2206 = vmatprep.subr.mxu0 0.0
        %2207 = vmatpush1.msra.mxu0 0.0
        %2208 = vmatprep.subr.mxu0 0.0
        %2209 = vmatpush1.msra.mxu0 0.0
        %2210 = vmatprep.subr.mxu0 0.0
        %2211 = vmatpush1.msra.mxu0 0.0
        %2212 = vmatprep.subr.mxu0 0.0
        %2213 = vmatpush1.msra.mxu0 0.0
        %2214 = vmatprep.subr.mxu0 0.0
        %2215 = vmatpush1.msra.mxu0 0.0
        %2216 = vmatprep.subr.mxu0 0.0
        %2217 = vmatpush1.msra.mxu0 0.0
        %2218 = vmatprep.subr.mxu0 0.0
        %2219 = vmatpush1.msra.mxu0 0.0
        %2220 = vmatprep.subr.mxu0 0.0
        %2221 = vmatpush1.msra.mxu0 0.0
        %2222 = vmatprep.subr.mxu0 0.0
        %2223 = vmatpush1.msra.mxu0 0.0
        %2224 = vmatprep.subr.mxu0 0.0
        %2225 = vmatpush1.msra.mxu0 0.0
        %2226 = vmatprep.subr.mxu0 0.0
        %2227 = vmatpush1.msra.mxu0 0.0
        %2228 = vmatprep.subr.mxu0 0.0
        %2229 = vmatpush1.msra.mxu0 0.0
        %2230 = vmatprep.subr.mxu0 0.0
        %2231 = vmatpush1.msra.mxu0 0.0
        %2232 = vmatprep.subr.mxu0 0.0
        %2233 = vmatpush1.msra.mxu0 0.0
        %2234 = vmatprep.subr.mxu0 0.0
        %2235 = vmatpush1.msra.mxu0 %v2204
        %2236 = vmatprep.subr.mxu0 0.0
        %2237 = vmatpush1.msra.mxu0 %v1696
        %2238 = vmatprep.subr.mxu0 0.0
        %2239 = vmatpush2.msra.mxu0 0.0
        %2240 = vmatprep.subr.mxu0 0.0
        %2241 = vmatpush2.msra.mxu0 0.0
        %2242 = vmatprep.subr.mxu0 0.0
        %2243 = vmatpush2.msra.mxu0 0.0
        %2244 = vmatprep.subr.mxu0 0.0
        %2245 = vmatpush2.msra.mxu0 0.0
        %2246 = vmatprep.subr.mxu0 0.0
        %2247 = vmatpush2.msra.mxu0 0.0
        %2248 = vmatprep.subr.mxu0 0.0
        %2249 = vmatpush2.msra.mxu0 0.0
        %2250 = vmatprep.subr.mxu0 0.0
        %2251 = vmatpush2.msra.mxu0 0.0
        %2252 = vmatprep.subr.mxu0 0.0
        %2253 = vmatpush2.msra.mxu0 0.0
        %2254 = vmatprep.subr.mxu0 0.0
        %2255 = vmatpush2.msra.mxu0 0.0
        %2256 = vmatprep.subr.mxu0 0.0
        %2257 = vmatpush2.msra.mxu0 0.0
        %2258 = vmatprep.subr.mxu0 0.0
        %2259 = vmatpush2.msra.mxu0 0.0
        %2260 = vmatprep.subr.mxu0 0.0
        %2261 = vmatpush2.msra.mxu0 0.0
        %2262 = vmatprep.subr.mxu0 0.0
        %2263 = vmatpush2.msra.mxu0 0.0
        %2264 = vmatprep.subr.mxu0 0.0
        %2265 = vmatpush2.msra.mxu0 0.0
        %2266 = vmatprep.subr.mxu0 0.0
        %2267 = vmatpush2.msra.mxu0 0.0
        %2268 = vmatprep.subr.mxu0 0.0
        %2269 = vmatpush2.msra.mxu0 0.0
        %2270 = vmatprep.mubr.f32.mxu0 0.0
        %2271 = vmatmul.mubr.f32.gmra.mxu0 %v1840
        %v2272 = vpop.f32.mrf.mxu0
        %v2273 = vadd.f32 0.0, %v2272
        %v2274 = vpop.f32.mrf.mxu0
        %2275 = vmatprep.mubr.f32.mxu0 0.0
        %2276 = vmatmul.mubr.f32.gmra.mxu0 %v1843
        %v2277 = vpop.f32.mrf.mxu0
        %v2278 = vadd.f32 0.0, %v2277
        %v2279 = vpop.f32.mrf.mxu0
        %2280 = vmatprep.mubr.f32.mxu0 0.0
        %2281 = vmatmul.mubr.f32.gmra.mxu0 %v1846
        %v2282 = vpop.f32.mrf.mxu0
        %v2283 = vadd.f32 0.0, %v2282
        %v2284 = vpop.f32.mrf.mxu0
        %2285 = vmatprep.mubr.f32.mxu0 0.0
        %2286 = vmatmul.mubr.f32.gmra.mxu0 %v1849
        %v2287 = vpop.f32.mrf.mxu0
        %v2288 = vadd.f32 0.0, %v2287
        %v2289 = vpop.f32.mrf.mxu0
        %2290 = vdwg.mxu0
        %v2292 = vsel %vm760, %v1831, 0
        %2294 = vmatprep.subr.mxu0 0.0
        %2295 = vmatpush1.msra.mxu0 0.0
        %2296 = vmatprep.subr.mxu0 0.0
        %2297 = vmatpush1.msra.mxu0 0.0
        %2298 = vmatprep.subr.mxu0 0.0
        %2299 = vmatpush1.msra.mxu0 0.0
        %2300 = vmatprep.subr.mxu0 0.0
        %2301 = vmatpush1.msra.mxu0 0.0
        %2302 = vmatprep.subr.mxu0 0.0
        %2303 = vmatpush1.msra.mxu0 0.0
        %2304 = vmatprep.subr.mxu0 0.0
        %2305 = vmatpush1.msra.mxu0 0.0
        %2306 = vmatprep.subr.mxu0 0.0
        %2307 = vmatpush1.msra.mxu0 0.0
        %2308 = vmatprep.subr.mxu0 0.0
        %2309 = vmatpush1.msra.mxu0 0.0
        %2310 = vmatprep.subr.mxu0 0.0
        %2311 = vmatpush1.msra.mxu0 0.0
        %2312 = vmatprep.subr.mxu0 0.0
        %2313 = vmatpush1.msra.mxu0 0.0
        %2314 = vmatprep.subr.mxu0 0.0
        %2315 = vmatpush1.msra.mxu0 0.0
        %2316 = vmatprep.subr.mxu0 0.0
        %2317 = vmatpush1.msra.mxu0 0.0
        %2318 = vmatprep.subr.mxu0 0.0
        %2319 = vmatpush1.msra.mxu0 0.0
        %2320 = vmatprep.subr.mxu0 0.0
        %2321 = vmatpush1.msra.mxu0 0.0
        %2322 = vmatprep.subr.mxu0 0.0
        %2323 = vmatpush1.msra.mxu0 %v2292
        %2324 = vmatprep.subr.mxu0 0.0
        %2325 = vmatpush1.msra.mxu0 %v1697
        %2326 = vmatprep.subr.mxu0 0.0
        %2327 = vmatpush2.msra.mxu0 0.0
        %2328 = vmatprep.subr.mxu0 0.0
        %2329 = vmatpush2.msra.mxu0 0.0
        %2330 = vmatprep.subr.mxu0 0.0
        %2331 = vmatpush2.msra.mxu0 0.0
        %2332 = vmatprep.subr.mxu0 0.0
        %2333 = vmatpush2.msra.mxu0 0.0
        %2334 = vmatprep.subr.mxu0 0.0
        %2335 = vmatpush2.msra.mxu0 0.0
        %2336 = vmatprep.subr.mxu0 0.0
        %2337 = vmatpush2.msra.mxu0 0.0
        %2338 = vmatprep.subr.mxu0 0.0
        %2339 = vmatpush2.msra.mxu0 0.0
        %2340 = vmatprep.subr.mxu0 0.0
        %2341 = vmatpush2.msra.mxu0 0.0
        %2342 = vmatprep.subr.mxu0 0.0
        %2343 = vmatpush2.msra.mxu0 0.0
        %2344 = vmatprep.subr.mxu0 0.0
        %2345 = vmatpush2.msra.mxu0 0.0
        %2346 = vmatprep.subr.mxu0 0.0
        %2347 = vmatpush2.msra.mxu0 0.0
        %2348 = vmatprep.subr.mxu0 0.0
        %2349 = vmatpush2.msra.mxu0 0.0
        %2350 = vmatprep.subr.mxu0 0.0
        %2351 = vmatpush2.msra.mxu0 0.0
        %2352 = vmatprep.subr.mxu0 0.0
        %2353 = vmatpush2.msra.mxu0 0.0
        %2354 = vmatprep.subr.mxu0 0.0
        %2355 = vmatpush2.msra.mxu0 0.0
        %2356 = vmatprep.subr.mxu0 0.0
        %2357 = vmatpush2.msra.mxu0 0.0
        %2358 = vmatprep.mubr.f32.mxu0 0.0
        %2359 = vmatmul.mubr.f32.gmra.mxu0 %v1840
        %v2360 = vpop.f32.mrf.mxu0
        %v2361 = vadd.f32 0.0, %v2360
        %v2362 = vpop.f32.mrf.mxu0
        %2363 = vmatprep.mubr.f32.mxu0 0.0
        %2364 = vmatmul.mubr.f32.gmra.mxu0 %v1843
        %v2365 = vpop.f32.mrf.mxu0
        %v2366 = vadd.f32 0.0, %v2365
        %v2367 = vpop.f32.mrf.mxu0
        %2368 = vmatprep.mubr.f32.mxu0 0.0
        %2369 = vmatmul.mubr.f32.gmra.mxu0 %v1846
        %v2370 = vpop.f32.mrf.mxu0
        %v2371 = vadd.f32 0.0, %v2370
        %v2372 = vpop.f32.mrf.mxu0
        %2373 = vmatprep.mubr.f32.mxu0 0.0
        %2374 = vmatmul.mubr.f32.gmra.mxu0 %v1849
        %v2375 = vpop.f32.mrf.mxu0
        %v2376 = vadd.f32 0.0, %v2375
        %v2377 = vpop.f32.mrf.mxu0
        %2378 = vdwg.mxu0
        %v2380 = vsel %vm760, %v1832, 0
        %2382 = vmatprep.subr.mxu0 0.0
        %2383 = vmatpush1.msra.mxu0 0.0
        %2384 = vmatprep.subr.mxu0 0.0
        %2385 = vmatpush1.msra.mxu0 0.0
        %2386 = vmatprep.subr.mxu0 0.0
        %2387 = vmatpush1.msra.mxu0 0.0
        %2388 = vmatprep.subr.mxu0 0.0
        %2389 = vmatpush1.msra.mxu0 0.0
        %2390 = vmatprep.subr.mxu0 0.0
        %2391 = vmatpush1.msra.mxu0 0.0
        %2392 = vmatprep.subr.mxu0 0.0
        %2393 = vmatpush1.msra.mxu0 0.0
        %2394 = vmatprep.subr.mxu0 0.0
        %2395 = vmatpush1.msra.mxu0 0.0
        %2396 = vmatprep.subr.mxu0 0.0
        %2397 = vmatpush1.msra.mxu0 0.0
        %2398 = vmatprep.subr.mxu0 0.0
        %2399 = vmatpush1.msra.mxu0 0.0
        %2400 = vmatprep.subr.mxu0 0.0
        %2401 = vmatpush1.msra.mxu0 0.0
        %2402 = vmatprep.subr.mxu0 0.0
        %2403 = vmatpush1.msra.mxu0 0.0
        %2404 = vmatprep.subr.mxu0 0.0
        %2405 = vmatpush1.msra.mxu0 0.0
        %2406 = vmatprep.subr.mxu0 0.0
        %2407 = vmatpush1.msra.mxu0 0.0
        %2408 = vmatprep.subr.mxu0 0.0
        %2409 = vmatpush1.msra.mxu0 0.0
        %2410 = vmatprep.subr.mxu0 0.0
        %2411 = vmatpush1.msra.mxu0 %v2380
        %2412 = vmatprep.subr.mxu0 0.0
        %2413 = vmatpush1.msra.mxu0 %v1698
        %2414 = vmatprep.subr.mxu0 0.0
        %2415 = vmatpush2.msra.mxu0 0.0
        %2416 = vmatprep.subr.mxu0 0.0
        %2417 = vmatpush2.msra.mxu0 0.0
        %2418 = vmatprep.subr.mxu0 0.0
        %2419 = vmatpush2.msra.mxu0 0.0
        %2420 = vmatprep.subr.mxu0 0.0
        %2421 = vmatpush2.msra.mxu0 0.0
        %2422 = vmatprep.subr.mxu0 0.0
        %2423 = vmatpush2.msra.mxu0 0.0
        %2424 = vmatprep.subr.mxu0 0.0
        %2425 = vmatpush2.msra.mxu0 0.0
        %2426 = vmatprep.subr.mxu0 0.0
        %2427 = vmatpush2.msra.mxu0 0.0
        %2428 = vmatprep.subr.mxu0 0.0
        %2429 = vmatpush2.msra.mxu0 0.0
        %2430 = vmatprep.subr.mxu0 0.0
        %2431 = vmatpush2.msra.mxu0 0.0
        %2432 = vmatprep.subr.mxu0 0.0
        %2433 = vmatpush2.msra.mxu0 0.0
        %2434 = vmatprep.subr.mxu0 0.0
        %2435 = vmatpush2.msra.mxu0 0.0
        %2436 = vmatprep.subr.mxu0 0.0
        %2437 = vmatpush2.msra.mxu0 0.0
        %2438 = vmatprep.subr.mxu0 0.0
        %2439 = vmatpush2.msra.mxu0 0.0
        %2440 = vmatprep.subr.mxu0 0.0
        %2441 = vmatpush2.msra.mxu0 0.0
        %2442 = vmatprep.subr.mxu0 0.0
        %2443 = vmatpush2.msra.mxu0 0.0
        %2444 = vmatprep.subr.mxu0 0.0
        %2445 = vmatpush2.msra.mxu0 0.0
        %2446 = vmatprep.mubr.f32.mxu0 0.0
        %2447 = vmatmul.mubr.f32.gmra.mxu0 %v1840
        %v2448 = vpop.f32.mrf.mxu0
        %v2449 = vadd.f32 0.0, %v2448
        %v2450 = vpop.f32.mrf.mxu0
        %2451 = vmatprep.mubr.f32.mxu0 0.0
        %2452 = vmatmul.mubr.f32.gmra.mxu0 %v1843
        %v2453 = vpop.f32.mrf.mxu0
        %v2454 = vadd.f32 0.0, %v2453
        %v2455 = vpop.f32.mrf.mxu0
        %2456 = vmatprep.mubr.f32.mxu0 0.0
        %2457 = vmatmul.mubr.f32.gmra.mxu0 %v1846
        %v2458 = vpop.f32.mrf.mxu0
        %v2459 = vadd.f32 0.0, %v2458
        %v2460 = vpop.f32.mrf.mxu0
        %2461 = vmatprep.mubr.f32.mxu0 0.0
        %2462 = vmatmul.mubr.f32.gmra.mxu0 %v1849
        %v2463 = vpop.f32.mrf.mxu0
        %v2464 = vadd.f32 0.0, %v2463
        %v2465 = vpop.f32.mrf.mxu0
        %2466 = vdwg.mxu0
        %v2468 = vsel %vm760, %v1833, 0
        %2470 = vmatprep.subr.mxu0 0.0
        %2471 = vmatpush1.msra.mxu0 0.0
        %2472 = vmatprep.subr.mxu0 0.0
        %2473 = vmatpush1.msra.mxu0 0.0
        %2474 = vmatprep.subr.mxu0 0.0
        %2475 = vmatpush1.msra.mxu0 0.0
        %2476 = vmatprep.subr.mxu0 0.0
        %2477 = vmatpush1.msra.mxu0 0.0
        %2478 = vmatprep.subr.mxu0 0.0
        %2479 = vmatpush1.msra.mxu0 0.0
        %2480 = vmatprep.subr.mxu0 0.0
        %2481 = vmatpush1.msra.mxu0 0.0
        %2482 = vmatprep.subr.mxu0 0.0
        %2483 = vmatpush1.msra.mxu0 0.0
        %2484 = vmatprep.subr.mxu0 0.0
        %2485 = vmatpush1.msra.mxu0 0.0
        %2486 = vmatprep.subr.mxu0 0.0
        %2487 = vmatpush1.msra.mxu0 0.0
        %2488 = vmatprep.subr.mxu0 0.0
        %2489 = vmatpush1.msra.mxu0 0.0
        %2490 = vmatprep.subr.mxu0 0.0
        %2491 = vmatpush1.msra.mxu0 0.0
        %2492 = vmatprep.subr.mxu0 0.0
        %2493 = vmatpush1.msra.mxu0 0.0
        %2494 = vmatprep.subr.mxu0 0.0
        %2495 = vmatpush1.msra.mxu0 0.0
        %2496 = vmatprep.subr.mxu0 0.0
        %2497 = vmatpush1.msra.mxu0 0.0
        %2498 = vmatprep.subr.mxu0 0.0
        %2499 = vmatpush1.msra.mxu0 %v2468
        %2500 = vmatprep.subr.mxu0 0.0
        %2501 = vmatpush1.msra.mxu0 %v1699
        %2502 = vmatprep.subr.mxu0 0.0
        %2503 = vmatpush2.msra.mxu0 0.0
        %2504 = vmatprep.subr.mxu0 0.0
        %2505 = vmatpush2.msra.mxu0 0.0
        %2506 = vmatprep.subr.mxu0 0.0
        %2507 = vmatpush2.msra.mxu0 0.0
        %2508 = vmatprep.subr.mxu0 0.0
        %2509 = vmatpush2.msra.mxu0 0.0
        %2510 = vmatprep.subr.mxu0 0.0
        %2511 = vmatpush2.msra.mxu0 0.0
        %2512 = vmatprep.subr.mxu0 0.0
        %2513 = vmatpush2.msra.mxu0 0.0
        %2514 = vmatprep.subr.mxu0 0.0
        %2515 = vmatpush2.msra.mxu0 0.0
        %2516 = vmatprep.subr.mxu0 0.0
        %2517 = vmatpush2.msra.mxu0 0.0
        %2518 = vmatprep.subr.mxu0 0.0
        %2519 = vmatpush2.msra.mxu0 0.0
        %2520 = vmatprep.subr.mxu0 0.0
        %2521 = vmatpush2.msra.mxu0 0.0
        %2522 = vmatprep.subr.mxu0 0.0
        %2523 = vmatpush2.msra.mxu0 0.0
        %2524 = vmatprep.subr.mxu0 0.0
        %2525 = vmatpush2.msra.mxu0 0.0
        %2526 = vmatprep.subr.mxu0 0.0
        %2527 = vmatpush2.msra.mxu0 0.0
        %2528 = vmatprep.subr.mxu0 0.0
        %2529 = vmatpush2.msra.mxu0 0.0
        %2530 = vmatprep.subr.mxu0 0.0
        %2531 = vmatpush2.msra.mxu0 0.0
        %2532 = vmatprep.subr.mxu0 0.0
        %2533 = vmatpush2.msra.mxu0 0.0
        %2534 = vmatprep.mubr.f32.mxu0 0.0
        %2535 = vmatmul.mubr.f32.gmra.mxu0 %v1840
        %v2536 = vpop.f32.mrf.mxu0
        %v2537 = vadd.f32 0.0, %v2536
        %v2538 = vpop.f32.mrf.mxu0
        %2539 = vmatprep.mubr.f32.mxu0 0.0
        %2540 = vmatmul.mubr.f32.gmra.mxu0 %v1843
        %v2541 = vpop.f32.mrf.mxu0
        %v2542 = vadd.f32 0.0, %v2541
        %v2543 = vpop.f32.mrf.mxu0
        %2544 = vmatprep.mubr.f32.mxu0 0.0
        %2545 = vmatmul.mubr.f32.gmra.mxu0 %v1846
        %v2546 = vpop.f32.mrf.mxu0
        %v2547 = vadd.f32 0.0, %v2546
        %v2548 = vpop.f32.mrf.mxu0
        %2549 = vmatprep.mubr.f32.mxu0 0.0
        %2550 = vmatmul.mubr.f32.gmra.mxu0 %v1849
        %v2551 = vpop.f32.mrf.mxu0
        %v2552 = vadd.f32 0.0, %v2551
        %v2553 = vpop.f32.mrf.mxu0
        %2554 = vdwg.mxu0
        %v2555 = vld [vmem:[%s3] sm:$0xff]
        %v2556 = vld [vmem:[%s3 + $0x8] sm:$0x3f]
        %v2558 = vsel %vm1838, %v1921, 0
        %v2561 = vsel %vm1838, %v1926, 0
        %v2564 = vsel %vm1838, %v1931, 0
        %v2567 = vsel %vm1838, %v1936, 0
        %v2570 = vsel %vm1838, %v2009, 0
        %v2573 = vsel %vm1838, %v2014, 0
        %v2576 = vsel %vm1838, %v2019, 0
        %v2579 = vsel %vm1838, %v2024, 0
        %v2582 = vsel %vm1838, %v2097, 0
        %v2585 = vsel %vm1838, %v2102, 0
        %v2588 = vsel %vm1838, %v2107, 0
        %v2591 = vsel %vm1838, %v2112, 0
        %v2594 = vsel %vm1838, %v2185, 0
        %v2597 = vsel %vm1838, %v2190, 0
        %v2600 = vsel %vm1838, %v2195, 0
        %v2603 = vsel %vm1838, %v2200, 0
        %v2606 = vsel %vm1838, %v2273, 0
        %v2609 = vsel %vm1838, %v2278, 0
        %v2612 = vsel %vm1838, %v2283, 0
        %v2615 = vsel %vm1838, %v2288, 0
        %v2618 = vsel %vm1838, %v2361, 0
        %v2621 = vsel %vm1838, %v2366, 0
        %v2624 = vsel %vm1838, %v2371, 0
        %v2627 = vsel %vm1838, %v2376, 0
        %v2630 = vsel %vm1838, %v2449, 0
        %v2633 = vsel %vm1838, %v2454, 0
        %v2636 = vsel %vm1838, %v2459, 0
        %v2639 = vsel %vm1838, %v2464, 0
        %v2642 = vsel %vm1838, %v2537, 0
        %v2645 = vsel %vm1838, %v2542, 0
        %v2648 = vsel %vm1838, %v2547, 0
        %v2651 = vsel %vm1838, %v2552, 0
        %v2654 = vsel %vm760, %v2556, 0
        %2656 = vmatprep.subr.mxu0 0.0
        %2657 = vmatpush1.msra.mxu0 0.0
        %2658 = vmatprep.subr.mxu0 0.0
        %2659 = vmatpush1.msra.mxu0 0.0
        %2660 = vmatprep.subr.mxu0 0.0
        %2661 = vmatpush1.msra.mxu0 0.0
        %2662 = vmatprep.subr.mxu0 0.0
        %2663 = vmatpush1.msra.mxu0 0.0
        %2664 = vmatprep.subr.mxu0 0.0
        %2665 = vmatpush1.msra.mxu0 0.0
        %2666 = vmatprep.subr.mxu0 0.0
        %2667 = vmatpush1.msra.mxu0 0.0
        %2668 = vmatprep.subr.mxu0 0.0
        %2669 = vmatpush1.msra.mxu0 0.0
        %2670 = vmatprep.subr.mxu0 0.0
        %2671 = vmatpush1.msra.mxu0 0.0
        %2672 = vmatprep.subr.mxu0 0.0
        %2673 = vmatpush1.msra.mxu0 0.0
        %2674 = vmatprep.subr.mxu0 0.0
        %2675 = vmatpush1.msra.mxu0 0.0
        %2676 = vmatprep.subr.mxu0 0.0
        %2677 = vmatpush1.msra.mxu0 0.0
        %2678 = vmatprep.subr.mxu0 0.0
        %2679 = vmatpush1.msra.mxu0 0.0
        %2680 = vmatprep.subr.mxu0 0.0
        %2681 = vmatpush1.msra.mxu0 0.0
        %2682 = vmatprep.subr.mxu0 0.0
        %2683 = vmatpush1.msra.mxu0 0.0
        %2684 = vmatprep.subr.mxu0 0.0
        %2685 = vmatpush1.msra.mxu0 %v2654
        %2686 = vmatprep.subr.mxu0 0.0
        %2687 = vmatpush1.msra.mxu0 %v2555
        %2688 = vmatprep.subr.mxu0 0.0
        %2689 = vmatpush2.msra.mxu0 0.0
        %2690 = vmatprep.subr.mxu0 0.0
        %2691 = vmatpush2.msra.mxu0 0.0
        %2692 = vmatprep.subr.mxu0 0.0
        %2693 = vmatpush2.msra.mxu0 0.0
        %2694 = vmatprep.subr.mxu0 0.0
        %2695 = vmatpush2.msra.mxu0 0.0
        %2696 = vmatprep.subr.mxu0 0.0
        %2697 = vmatpush2.msra.mxu0 0.0
        %2698 = vmatprep.subr.mxu0 0.0
        %2699 = vmatpush2.msra.mxu0 0.0
        %2700 = vmatprep.subr.mxu0 0.0
        %2701 = vmatpush2.msra.mxu0 0.0
        %2702 = vmatprep.subr.mxu0 0.0
        %2703 = vmatpush2.msra.mxu0 0.0
        %2704 = vmatprep.subr.mxu0 0.0
        %2705 = vmatpush2.msra.mxu0 0.0
        %2706 = vmatprep.subr.mxu0 0.0
        %2707 = vmatpush2.msra.mxu0 0.0
        %2708 = vmatprep.subr.mxu0 0.0
        %2709 = vmatpush2.msra.mxu0 0.0
        %2710 = vmatprep.subr.mxu0 0.0
        %2711 = vmatpush2.msra.mxu0 0.0
        %2712 = vmatprep.subr.mxu0 0.0
        %2713 = vmatpush2.msra.mxu0 0.0
        %2714 = vmatprep.subr.mxu0 0.0
        %2715 = vmatpush2.msra.mxu0 0.0
        %2716 = vmatprep.subr.mxu0 0.0
        %2717 = vmatpush2.msra.mxu0 0.0
        %2718 = vmatprep.subr.mxu0 0.0
        %2719 = vmatpush2.msra.mxu0 0.0
        %2720 = vmatprep.mubr.f32.mxu0 0.0
        %2721 = vmatmul.mubr.f32.gmra.mxu0 %v2558
        %v2722 = vpop.f32.mrf.mxu0
        %v2723 = vadd.f32 0.0, %v2722
        %v2724 = vpop.f32.mrf.mxu0
        %2725 = vmatprep.mubr.f32.mxu0 0.0
        %2726 = vmatmul.mubr.f32.gmra.mxu0 %v2561
        %v2727 = vpop.f32.mrf.mxu0
        %v2728 = vadd.f32 0.0, %v2727
        %v2729 = vpop.f32.mrf.mxu0
        %2730 = vmatprep.mubr.f32.mxu0 0.0
        %2731 = vmatmul.mubr.f32.gmra.mxu0 %v2564
        %v2732 = vpop.f32.mrf.mxu0
        %v2733 = vadd.f32 0.0, %v2732
        %v2734 = vpop.f32.mrf.mxu0
        %2735 = vmatprep.mubr.f32.mxu0 0.0
        %2736 = vmatmul.mubr.f32.gmra.mxu0 %v2567
        %v2737 = vpop.f32.mrf.mxu0
        %v2738 = vadd.f32 0.0, %v2737
        %v2739 = vpop.f32.mrf.mxu0
        %2740 = vmatprep.mubr.f32.mxu0 0.0
        %2741 = vmatmul.mubr.f32.gmra.mxu0 %v2570
        %v2742 = vpop.f32.mrf.mxu0
        %v2743 = vadd.f32 0.0, %v2742
        %v2744 = vpop.f32.mrf.mxu0
        %2745 = vmatprep.mubr.f32.mxu0 0.0
        %2746 = vmatmul.mubr.f32.gmra.mxu0 %v2573
        %v2747 = vpop.f32.mrf.mxu0
        %v2748 = vadd.f32 0.0, %v2747
        %v2749 = vpop.f32.mrf.mxu0
        %2750 = vmatprep.mubr.f32.mxu0 0.0
        %2751 = vmatmul.mubr.f32.gmra.mxu0 %v2576
        %v2752 = vpop.f32.mrf.mxu0
        %v2753 = vadd.f32 0.0, %v2752
        %v2754 = vpop.f32.mrf.mxu0
        %2755 = vmatprep.mubr.f32.mxu0 0.0
        %2756 = vmatmul.mubr.f32.gmra.mxu0 %v2579
        %v2757 = vpop.f32.mrf.mxu0
        %v2758 = vadd.f32 0.0, %v2757
        %v2759 = vpop.f32.mrf.mxu0
        %2760 = vmatprep.mubr.f32.mxu0 0.0
        %2761 = vmatmul.mubr.f32.gmra.mxu0 %v2582
        %v2762 = vpop.f32.mrf.mxu0
        %v2763 = vadd.f32 0.0, %v2762
        %v2764 = vpop.f32.mrf.mxu0
        %2765 = vmatprep.mubr.f32.mxu0 0.0
        %2766 = vmatmul.mubr.f32.gmra.mxu0 %v2585
        %v2767 = vpop.f32.mrf.mxu0
        %v2768 = vadd.f32 0.0, %v2767
        %v2769 = vpop.f32.mrf.mxu0
        %2770 = vmatprep.mubr.f32.mxu0 0.0
        %2771 = vmatmul.mubr.f32.gmra.mxu0 %v2588
        %v2772 = vpop.f32.mrf.mxu0
        %v2773 = vadd.f32 0.0, %v2772
        %v2774 = vpop.f32.mrf.mxu0
        %2775 = vmatprep.mubr.f32.mxu0 0.0
        %2776 = vmatmul.mubr.f32.gmra.mxu0 %v2591
        %v2777 = vpop.f32.mrf.mxu0
        %v2778 = vadd.f32 0.0, %v2777
        %v2779 = vpop.f32.mrf.mxu0
        %2780 = vmatprep.mubr.f32.mxu0 0.0
        %2781 = vmatmul.mubr.f32.gmra.mxu0 %v2594
        %v2782 = vpop.f32.mrf.mxu0
        %v2783 = vadd.f32 0.0, %v2782
        %v2784 = vpop.f32.mrf.mxu0
        %2785 = vmatprep.mubr.f32.mxu0 0.0
        %2786 = vmatmul.mubr.f32.gmra.mxu0 %v2597
        %v2787 = vpop.f32.mrf.mxu0
        %v2788 = vadd.f32 0.0, %v2787
        %v2789 = vpop.f32.mrf.mxu0
        %2790 = vmatprep.mubr.f32.mxu0 0.0
        %2791 = vmatmul.mubr.f32.gmra.mxu0 %v2600
        %v2792 = vpop.f32.mrf.mxu0
        %v2793 = vadd.f32 0.0, %v2792
        %v2794 = vpop.f32.mrf.mxu0
        %2795 = vmatprep.mubr.f32.mxu0 0.0
        %2796 = vmatmul.mubr.f32.gmra.mxu0 %v2603
        %v2797 = vpop.f32.mrf.mxu0
        %v2798 = vadd.f32 0.0, %v2797
        %v2799 = vpop.f32.mrf.mxu0
        %2800 = vmatprep.mubr.f32.mxu0 0.0
        %2801 = vmatmul.mubr.f32.gmra.mxu0 %v2606
        %v2802 = vpop.f32.mrf.mxu0
        %v2803 = vadd.f32 0.0, %v2802
        %v2804 = vpop.f32.mrf.mxu0
        %2805 = vmatprep.mubr.f32.mxu0 0.0
        %2806 = vmatmul.mubr.f32.gmra.mxu0 %v2609
        %v2807 = vpop.f32.mrf.mxu0
        %v2808 = vadd.f32 0.0, %v2807
        %v2809 = vpop.f32.mrf.mxu0
        %2810 = vmatprep.mubr.f32.mxu0 0.0
        %2811 = vmatmul.mubr.f32.gmra.mxu0 %v2612
        %v2812 = vpop.f32.mrf.mxu0
        %v2813 = vadd.f32 0.0, %v2812
        %v2814 = vpop.f32.mrf.mxu0
        %2815 = vmatprep.mubr.f32.mxu0 0.0
        %2816 = vmatmul.mubr.f32.gmra.mxu0 %v2615
        %v2817 = vpop.f32.mrf.mxu0
        %v2818 = vadd.f32 0.0, %v2817
        %v2819 = vpop.f32.mrf.mxu0
        %2820 = vmatprep.mubr.f32.mxu0 0.0
        %2821 = vmatmul.mubr.f32.gmra.mxu0 %v2618
        %v2822 = vpop.f32.mrf.mxu0
        %v2823 = vadd.f32 0.0, %v2822
        %v2824 = vpop.f32.mrf.mxu0
        %2825 = vmatprep.mubr.f32.mxu0 0.0
        %2826 = vmatmul.mubr.f32.gmra.mxu0 %v2621
        %v2827 = vpop.f32.mrf.mxu0
        %v2828 = vadd.f32 0.0, %v2827
        %v2829 = vpop.f32.mrf.mxu0
        %2830 = vmatprep.mubr.f32.mxu0 0.0
        %2831 = vmatmul.mubr.f32.gmra.mxu0 %v2624
        %v2832 = vpop.f32.mrf.mxu0
        %v2833 = vadd.f32 0.0, %v2832
        %v2834 = vpop.f32.mrf.mxu0
        %2835 = vmatprep.mubr.f32.mxu0 0.0
        %2836 = vmatmul.mubr.f32.gmra.mxu0 %v2627
        %v2837 = vpop.f32.mrf.mxu0
        %v2838 = vadd.f32 0.0, %v2837
        %v2839 = vpop.f32.mrf.mxu0
        %2840 = vmatprep.mubr.f32.mxu0 0.0
        %2841 = vmatmul.mubr.f32.gmra.mxu0 %v2630
        %v2842 = vpop.f32.mrf.mxu0
        %v2843 = vadd.f32 0.0, %v2842
        %v2844 = vpop.f32.mrf.mxu0
        %2845 = vmatprep.mubr.f32.mxu0 0.0
        %2846 = vmatmul.mubr.f32.gmra.mxu0 %v2633
        %v2847 = vpop.f32.mrf.mxu0
        %v2848 = vadd.f32 0.0, %v2847
        %v2849 = vpop.f32.mrf.mxu0
        %2850 = vmatprep.mubr.f32.mxu0 0.0
        %2851 = vmatmul.mubr.f32.gmra.mxu0 %v2636
        %v2852 = vpop.f32.mrf.mxu0
        %v2853 = vadd.f32 0.0, %v2852
        %v2854 = vpop.f32.mrf.mxu0
        %2855 = vmatprep.mubr.f32.mxu0 0.0
        %2856 = vmatmul.mubr.f32.gmra.mxu0 %v2639
        %v2857 = vpop.f32.mrf.mxu0
        %v2858 = vadd.f32 0.0, %v2857
        %v2859 = vpop.f32.mrf.mxu0
        %2860 = vmatprep.mubr.f32.mxu0 0.0
        %2861 = vmatmul.mubr.f32.gmra.mxu0 %v2642
        %v2862 = vpop.f32.mrf.mxu0
        %v2863 = vadd.f32 0.0, %v2862
        %v2864 = vpop.f32.mrf.mxu0
        %2865 = vmatprep.mubr.f32.mxu0 0.0
        %2866 = vmatmul.mubr.f32.gmra.mxu0 %v2645
        %v2867 = vpop.f32.mrf.mxu0
        %v2868 = vadd.f32 0.0, %v2867
        %v2869 = vpop.f32.mrf.mxu0
        %2870 = vmatprep.mubr.f32.mxu0 0.0
        %2871 = vmatmul.mubr.f32.gmra.mxu0 %v2648
        %v2872 = vpop.f32.mrf.mxu0
        %v2873 = vadd.f32 0.0, %v2872
        %v2874 = vpop.f32.mrf.mxu0
        %2875 = vmatprep.mubr.f32.mxu0 0.0
        %2876 = vmatmul.mubr.f32.gmra.mxu0 %v2651
        %v2877 = vpop.f32.mrf.mxu0
        %v2878 = vadd.f32 0.0, %v2877
        %v2879 = vpop.f32.mrf.mxu0
        %2880 = vdwg.mxu0
        %vm2881 = vcmask 261120
        %2882 = vst.msk [vmem:[%s215] sm:$0xff] %vm2881, %v2723
        %2883 = vst.msk [vmem:[%s215 + $0x8] sm:$0xff] %vm2881, %v2728
        %2884 = vst.msk [vmem:[%s215 + $0x10] sm:$0xff] %vm2881, %v2733
        %2885 = vst.msk [vmem:[%s215 + $0x18] sm:$0xff] %vm2881, %v2738
        %2886 = vst.msk [vmem:[%s215 + $0x20] sm:$0xff] %vm2881, %v2743
        %2887 = vst.msk [vmem:[%s215 + $0x28] sm:$0xff] %vm2881, %v2748
        %2888 = vst.msk [vmem:[%s215 + $0x30] sm:$0xff] %vm2881, %v2753
        %2889 = vst.msk [vmem:[%s215 + $0x38] sm:$0xff] %vm2881, %v2758
        %2890 = vst.msk [vmem:[%s215 + $0x40] sm:$0xff] %vm2881, %v2763
        %2891 = vst.msk [vmem:[%s215 + $0x48] sm:$0xff] %vm2881, %v2768
        %2892 = vst.msk [vmem:[%s215 + $0x50] sm:$0xff] %vm2881, %v2773
        %2893 = vst.msk [vmem:[%s215 + $0x58] sm:$0xff] %vm2881, %v2778
        %2894 = vst.msk [vmem:[%s215 + $0x60] sm:$0xff] %vm2881, %v2783
        %2895 = vst.msk [vmem:[%s215 + $0x68] sm:$0xff] %vm2881, %v2788
        %2896 = vst.msk [vmem:[%s215 + $0x70] sm:$0xff] %vm2881, %v2793
        %2897 = vst.msk [vmem:[%s215 + $0x78] sm:$0xff] %vm2881, %v2798
        %2898 = vst.msk [vmem:[%s215 + $0x80] sm:$0xff] %vm2881, %v2803
        %2899 = vst.msk [vmem:[%s215 + $0x88] sm:$0xff] %vm2881, %v2808
        %2900 = vst.msk [vmem:[%s215 + $0x90] sm:$0xff] %vm2881, %v2813
        %2901 = vst.msk [vmem:[%s215 + $0x98] sm:$0xff] %vm2881, %v2818
        %2902 = vst.msk [vmem:[%s215 + $0xa0] sm:$0xff] %vm2881, %v2823
        %2903 = vst.msk [vmem:[%s215 + $0xa8] sm:$0xff] %vm2881, %v2828
        %2904 = vst.msk [vmem:[%s215 + $0xb0] sm:$0xff] %vm2881, %v2833
        %2905 = vst.msk [vmem:[%s215 + $0xb8] sm:$0xff] %vm2881, %v2838
        %2906 = vst.msk [vmem:[%s215 + $0xc0] sm:$0xff] %vm2881, %v2843
        %2907 = vst.msk [vmem:[%s215 + $0xc8] sm:$0xff] %vm2881, %v2848
        %2908 = vst.msk [vmem:[%s215 + $0xd0] sm:$0xff] %vm2881, %v2853
        %2909 = vst.msk [vmem:[%s215 + $0xd8] sm:$0xff] %vm2881, %v2858
        %2910 = vst.msk [vmem:[%s215 + $0xe0] sm:$0xff] %vm2881, %v2863
        %2911 = vst.msk [vmem:[%s215 + $0xe8] sm:$0xff] %vm2881, %v2868
        %2912 = vst.msk [vmem:[%s215 + $0xf0] sm:$0xff] %vm2881, %v2873
        %2913 = vst.msk [vmem:[%s215 + $0xf8] sm:$0xff] %vm2881, %v2878
        %s2914 = sand.u32 %s118, 1
        %s2915 = scalar_lea.sflag [#allocation4], %s2914
        %s2916 = sand.u32 %s118, 1
        %s2917 = smul.addr %s2916, 256
        %s2918 = scalar_lea.vmem [#allocation5], %s2917
        // Predicated region
        $region41: #{tpu_custom_call.1} parent=35 // pred_check
          %p2919 = pneg %p128
        $region42: #{tpu_custom_call.1} parent=35 // pred_check_branch
          %2921 = sbr.rel (%p2919) target = $region44
        $region43: #{tpu_custom_call.1} parent=35 // pred_region
          %s2923 = ssub.s32 4096, 4096
          %2924 = vsyncadd %s2915, %s2923
          %s2925 = smul.addr %s21, 32
          %s2926 = smul.addr %s2925, 128
          %s2927 = scalar_lea.hbm %s4, %s2926
          %s2928 = sshll.u32 %s2918, 4
          %s2929 = int_to_ptr.vmem [resolvable:$true] %s2928
          %2934 = dma.vmem_to_hbm [thread:$0]  %s2929, 4096, %s2927, %s2915, 128, 128, 8
        $region44: #{tpu_custom_call.1} parent=35 // pred_fallthru
          _
      $region36: #{tpu_custom_call.1} parent=5 // pred_fallthru
        _
      %p2935 = scmp.le.s32.totalorder 2, %s16
      // Predicated region
      $region45: #{tpu_custom_call.1} parent=5 // pred_check
        %p2936 = pneg %p2935
      $region46: #{tpu_custom_call.1} parent=5 // pred_check_branch
        %2938 = sbr.rel (%p2936) target = $region48
      $region47: #{tpu_custom_call.1} parent=5 // pred_region
        %s2939 = ssub.s32 %s16, 2
        // Predicated region
        $region49: #{tpu_custom_call.1} parent=47 // pred_check
          %p2940 = pneg %p134
        $region50: #{tpu_custom_call.1} parent=47 // pred_check_branch
          %2942 = sbr.rel (%p2940) target = $region52
        $region51: #{tpu_custom_call.1} parent=47 // pred_region
          %s2943 = sand.u32 %s119, 1
          %s2944 = scalar_lea.sflag [#allocation4], %s2943
          %s2945 = sand.u32 %s119, 1
          %s2946 = smul.addr %s2945, 256
          %s2947 = scalar_lea.vmem [#allocation5], %s2946
          %2948 = dma.done %s2944, 4096
        $region52: #{tpu_custom_call.1} parent=47 // pred_fallthru
          _
      $region48: #{tpu_custom_call.1} parent=5 // pred_fallthru
        _
    $region6: #{tpu_custom_call.1} parent=1 // loop_footer
      %s20 = sadd.s32 1, %s16
    $region7: #{tpu_custom_call.1} parent=1 // loop_footer_branch
      %15 = sbr.rel target = $region3
    $region8: #{tpu_custom_call.1} parent=1 // loop_exit
      _
    %2949 = vsyncpa [#allocation3], 1
    %s2950 = scalar_lea.sflag [#allocation3], 1
    %2951 = vsyncpa %s2950, 1
    %2952 = vsyncpa [#allocation4], 1
    %s2953 = scalar_lea.sflag [#allocation4], 1
    %2954 = vsyncpa %s2953, 1

</llo_original>
